<compile_context>
chip_gen: v7x
topology: tpu7x:2x2x1
jax: 0.10.0
libtpu: 0.0.40
codegen_flags: <defaults>
</compile_context>

<pallas_src>
import numpy as np
import jax
import jax.numpy as jnp
from jax.experimental import pallas as pl
from jax.experimental.pallas import tpu as pltpu

BN_EPS = 1e-5


def _round_up(x, m):
    return -(-x // m) * m


# --------------------------------------------------------------------------
# Parameter setup (plain-JAX glue: deterministic init + frozen spectral norm)
# --------------------------------------------------------------------------
def _spectral_normalize(W, key, n_power_iterations=5):
    # W: [out_dim, in_dim]  (torch spectral_norm: forward uses weight_orig/sigma)
    out_dim, _ = W.shape
    u = jax.random.normal(key, (out_dim,), dtype=jnp.float32)
    u = u / (jnp.linalg.norm(u) + 1e-12)
    v = None
    for _ in range(n_power_iterations):
        v = W.T @ u
        v = v / (jnp.linalg.norm(v) + 1e-12)
        u = W @ v
        u = u / (jnp.linalg.norm(u) + 1e-12)
    sigma = u @ (W @ v)
    return W / sigma


def _kaiming_normal(key, out_dim, in_dim):
    # init.kaiming_normal_(nonlinearity='leaky_relu', a=0, mode='fan_in')
    std = np.sqrt(2.0) / np.sqrt(in_dim)
    return std * jax.random.normal(key, (out_dim, in_dim), dtype=jnp.float32)


def _xavier_normal(key, out_dim, in_dim):
    std = np.sqrt(2.0 / (in_dim + out_dim))
    return std * jax.random.normal(key, (out_dim, in_dim), dtype=jnp.float32)


def _make_sn_linear(key, out_dim, in_dim, init_fn):
    kw, kb, ku = jax.random.split(key, 3)
    W = init_fn(kw, out_dim, in_dim)          # weight_orig [out, in]
    W = _spectral_normalize(W, ku)            # weight = weight_orig / sigma
    bound = 1.0 / np.sqrt(in_dim)             # nn.Linear default bias init
    b = jax.random.uniform(kb, (out_dim,), jnp.float32, -bound, bound)
    return W, b                               # [out, in], [out]


def _make_resblock_raw(key, in_dim, out_dim):
    k_fc, k_ds = jax.random.split(key, 2)
    W, b = _make_sn_linear(k_fc, out_dim, in_dim, _kaiming_normal)
    blk = dict(W=W, b=b,
               gamma=jnp.ones((out_dim,), jnp.float32),
               beta=jnp.zeros((out_dim,), jnp.float32),
               swish_beta=1.0, W_ds=None, b_ds=None)
    if in_dim != out_dim:                      # downsample path
        W_ds, b_ds = _make_sn_linear(k_ds, out_dim, in_dim, _kaiming_normal)
        blk['W_ds'], blk['b_ds'] = W_ds, b_ds
    return blk


def build_raw_params(key, Encoder_layer_dims, Decoder_layer_dims,
                     hidden_dim_layer_out_Z, z_dim, hidden_dim_layer0,
                     input_dim):
    n_keys = (len(Encoder_layer_dims) - 1) + (len(Decoder_layer_dims) - 1) + 3
    it = iter(jax.random.split(key, n_keys))
    raw = dict(enc=[], dec=[])
    for i in range(len(Encoder_layer_dims) - 1):
        raw['enc'].append(_make_resblock_raw(next(it),
                                             Encoder_layer_dims[i],
                                             Encoder_layer_dims[i + 1]))
    raw['fc21'] = _make_sn_linear(next(it), z_dim, hidden_dim_layer_out_Z,
                                  _xavier_normal)
    raw['fc22'] = _make_sn_linear(next(it), z_dim, hidden_dim_layer_out_Z,
                                  _xavier_normal)
    for i in range(len(Decoder_layer_dims) - 1):
        raw['dec'].append(_make_resblock_raw(next(it),
                                             Decoder_layer_dims[i],
                                             Decoder_layer_dims[i + 1]))
    raw['fc4'] = _make_sn_linear(next(it), input_dim, hidden_dim_layer0,
                                 _xavier_normal)
    return raw


# --------------------------------------------------------------------------
# Pack parameters into a few slabs (fusing fc+downsample and fc21+fc22).
# Weights are [out, in]; fused segments are stacked along OUT (sublane) at
# 8-aligned offsets so in-kernel segment slices are tile-aligned.
# --------------------------------------------------------------------------
def pack_params(raw, batch):
    mats, vecs, swish = [], [], []

    def add_mat(W):
        mats.append(W)
        return len(mats) - 1

    def add_vec(v):
        vecs.append(v)
        return len(vecs) - 1

    def pack_block(blk):
        out_fc, in_dim = int(blk['W'].shape[0]), int(blk['W'].shape[1])
        ds_off = _round_up(out_fc, 8)
        if blk['W_ds'] is not None:
            out_ds = int(blk['W_ds'].shape[0])
            n_rows = ds_off + out_ds
            W = jnp.zeros((n_rows, in_dim), jnp.float32)
            W = W.at[:out_fc, :].set(blk['W'])
            W = W.at[ds_off:ds_off + out_ds, :].set(blk['W_ds'])
            b = jnp.zeros((n_rows,), jnp.float32)
            b = b.at[:out_fc].set(blk['b'])
            b = b.at[ds_off:ds_off + out_ds].set(blk['b_ds'])
        else:
            out_ds, n_rows, W, b = 0, out_fc, blk['W'], blk['b']
        m = dict(w_idx=add_mat(W), n_rows=int(n_rows), n_fc=out_fc,
                 ds_off=int(ds_off), n_ds=int(out_ds),
                 has_ds=blk['W_ds'] is not None,
                 b_row=add_vec(b), g_row=add_vec(blk['gamma']),
                 bt_row=add_vec(blk['beta']), sb_idx=len(swish))
        swish.append(float(blk['swish_beta']))
        return m

    enc_meta = [pack_block(blk) for blk in raw['enc']]

    # fc21 | fc22 fused into one matmul, stacked along the out/sublane axis.
    W21, b21 = raw['fc21']
    W22, b22 = raw['fc22']
    z_dim, hid = int(W21.shape[0]), int(W21.shape[1])
    z_off = _round_up(z_dim, 8)
    Wz = jnp.zeros((z_off + z_dim, hid), jnp.float32)
    Wz = Wz.at[:z_dim, :].set(W21).at[z_off:z_off + z_dim, :].set(W22)
    bz = jnp.zeros((z_off + z_dim,), jnp.float32)
    bz = bz.at[:z_dim].set(b21).at[z_off:z_off + z_dim].set(b22)
    z_meta = dict(w_idx=add_mat(Wz), n_rows=int(z_off + z_dim),
                  b_row=add_vec(bz))

    dec_meta = [pack_block(blk) for blk in raw['dec']]

    W4, b4 = raw['fc4']
    fc4_meta = dict(w_idx=add_mat(W4), n_rows=int(W4.shape[0]),
                    b_row=add_vec(b4))
    input_dim = int(W4.shape[0])

    kin_pad = _round_up(max(int(w.shape[1]) for w in mats), 8)   # contracting
    kout_pad = _round_up(max(int(w.shape[0]) for w in mats), 8)  # out rows
    vlen_pad = _round_up(max(int(v.shape[0]) for v in vecs), 8)

    def pad_mat(W):
        out = jnp.zeros((kout_pad, kin_pad), jnp.float32)
        return out.at[:W.shape[0], :W.shape[1]].set(W)

    def pad_vec(v):
        col = jnp.zeros((vlen_pad,), jnp.float32).at[:v.shape[0]].set(v)
        # Pre-broadcast across the 128-lane batch axis: dense in-kernel loads,
        # zero per-layer lane broadcasts (HBM BW is idle; the VPU is not).
        return jnp.broadcast_to(col[:, None], (vlen_pad, batch))

    w_slab = jnp.stack([pad_mat(w) for w in mats])       # [n_mats, Kout, Kin]
    vec_slab = jnp.stack([pad_vec(v) for v in vecs])     # [n_vecs, Vpad, B]
    swish_arr = jnp.array(swish, jnp.float32)            # [n_blocks] (SMEM)

    mulv_off = _round_up(input_dim, 8)
    dims = dict(input_dim=input_dim, z_dim=z_dim, z_off=z_off,
                kin_pad=kin_pad, mulv_off=mulv_off,
                out_rows=mulv_off + z_off + z_dim, batch=batch)
    meta = (enc_meta, z_meta, dec_meta, fc4_meta)
    return w_slab, vec_slab, swish_arr, meta, dims


# --------------------------------------------------------------------------
# Pallas kernel (single gridless block; activations in [feature, batch])
# --------------------------------------------------------------------------
def _make_kernel(enc_meta, z_meta, dec_meta, fc4_meta, dims):
    z_dim, z_off = dims['z_dim'], dims['z_off']
    kin_pad = dims['kin_pad']
    input_dim, mulv_off = dims['input_dim'], dims['mulv_off']

    def kernel(x_ref, eps_ref, w_ref, v_ref, sb_ref, out_ref):

        def pad_rows(h):
            # Zero-pad the feature (sublane) axis up to the common contracting
            # width; the matching weight columns are also zero, so it's exact.
            cur = h.shape[0]
            if cur == kin_pad:
                return h
            return jnp.concatenate(
                [h, jnp.zeros((kin_pad - cur, h.shape[1]), jnp.float32)],
                axis=0)

        def linear(h, m):
            # Full padded weight block (no sub-width lane slicing of the
            # matmul operand); [:n_rows] is a static 8-aligned sublane slice.
            W = w_ref[m['w_idx'], :m['n_rows'], :]
            out = jnp.dot(W, pad_rows(h), preferred_element_type=jnp.float32)
            return out + v_ref[m['b_row'], :m['n_rows'], :]

        def resblock(h, m):
            out_all = linear(h, m)                   # fc (+ downsample) fused
            out = out_all[:m['n_fc'], :]
            if m['has_ds']:
                h_res = out_all[m['ds_off']:m['ds_off'] + m['n_ds'], :]
            else:
                h_res = h
            # BatchNorm1d (training mode): batch stats over the lane axis,
            # centered two-pass variance (no cancellation risk).
            mean = jnp.mean(out, axis=1, keepdims=True)
            d = out - mean
            var = jnp.mean(d * d, axis=1, keepdims=True)
            xhat = d * jax.lax.rsqrt(var + BN_EPS)
            y = (xhat * v_ref[m['g_row'], :m['n_fc'], :]
                 + v_ref[m['bt_row'], :m['n_fc'], :])
            sb = sb_ref[m['sb_idx']]                 # trainable Swish beta
            y = y * jax.nn.sigmoid(sb * y)
            return y + h_res

        h = x_ref[...]                               # [input_dim, B] lane-dense
        for m in enc_meta:                           # Encoder_resblocks
            h = resblock(h, m)
        mulv = linear(h, z_meta)                     # fc21|fc22 -> [mu ; logvar]
        mu = mulv[:z_dim, :]
        logvar = mulv[z_off:z_off + z_dim, :]
        z = mu + eps_ref[...] * jnp.exp(0.5 * logvar)   # reparameterize
        h = z
        for m in dec_meta:                           # Decoder_resblocks
            h = resblock(h, m)
        recon = linear(h, fc4_meta)                  # fc4
        # Lane-dense output: [recon ; mu|logvar] along sublanes, 128-lane
        # unmasked stores at static 8-aligned offsets.
        out_ref[:input_dim, :] = recon
        out_ref[mulv_off:mulv_off + z_off + z_dim, :] = mulv

    return kernel


def continuous_residual_vae_forward(x, eps, packed):
    w_slab, vec_slab, swish_arr, meta, dims = packed
    enc_meta, z_meta, dec_meta, fc4_meta = meta
    B = x.shape[0]
    input_dim, z_dim = dims['input_dim'], dims['z_dim']
    z_off, mulv_off = dims['z_off'], dims['mulv_off']
    kernel = _make_kernel(enc_meta, z_meta, dec_meta, fc4_meta, dims)
    vmem = pl.BlockSpec(memory_space=pltpu.MemorySpace.VMEM)
    smem = pl.BlockSpec(memory_space=pltpu.MemorySpace.SMEM)
    out = pl.pallas_call(
        kernel,
        out_shape=jax.ShapeDtypeStruct((dims['out_rows'], B), jnp.float32),
        in_specs=[vmem, vmem, vmem, vmem, smem],
        out_specs=vmem,
    )(x.T, eps.T, w_slab, vec_slab, swish_arr)
    # Wrapper-side layout plumbing: slice the lane-dense block and transpose
    # back to PyTorch's [batch, dim] orientation.
    recon = out[:input_dim, :].T
    mu = out[mulv_off:mulv_off + z_dim, :].T
    logvar = out[mulv_off + z_off:mulv_off + z_off + z_dim, :].T
    return recon, mu, logvar


# --------------------------------------------------------------------------
# Pure-JAX reference (mirrors PyTorch forward math on the unpacked params)
# --------------------------------------------------------------------------
def _vae_reference(x, eps, raw):
    def linear(h, W, b):
        return h @ W.T + b

    def resblock(h, blk):
        out = linear(h, blk['W'], blk['b'])
        mean = jnp.mean(out, axis=0, keepdims=True)
        var = jnp.mean((out - mean) ** 2, axis=0, keepdims=True)
        out = (out - mean) / jnp.sqrt(var + BN_EPS) * blk['gamma'] + blk['beta']
        out = out * jax.nn.sigmoid(blk['swish_beta'] * out)
        if blk['W_ds'] is not None:
            h = linear(h, blk['W_ds'], blk['b_ds'])
        return out + h

    h = x
    for blk in raw['enc']:
        h = resblock(h, blk)
    mu = linear(h, *raw['fc21'])
    logvar = linear(h, *raw['fc22'])
    z = mu + eps * jnp.exp(0.5 * logvar)
    h = z
    for blk in raw['dec']:
        h = resblock(h, blk)
    recon = linear(h, *raw['fc4'])
    return recon, mu, logvar


# --------------------------------------------------------------------------
# Driver
# --------------------------------------------------------------------------
if __name__ == "__main__":
    key = jax.random.PRNGKey(0)
    k_params, k_x, k_eps = jax.random.split(key, 3)

    # Small shapes consistent with the module's hyperparameter structure.
    # batch = 128 so the lane (batch) axis of every activation is fully dense.
    batch = 128
    input_dim = 32
    hidden_dim_layer0 = 32
    layer_encoder_dims = [32]          # num_blocks = 2 -> one intermediate layer
    hidden_dim_layer_out_Z = 32
    z_dim = 16
    layer_decoder_dims = [32]

    Encoder_layer_dims = ([input_dim, hidden_dim_layer0]
                          + layer_encoder_dims + [hidden_dim_layer_out_Z])
    Decoder_layer_dims = [z_dim] + layer_decoder_dims + [hidden_dim_layer0]

    raw = build_raw_params(k_params, Encoder_layer_dims, Decoder_layer_dims,
                           hidden_dim_layer_out_Z, z_dim, hidden_dim_layer0,
                           input_dim)
    packed = pack_params(raw, batch)

    x = jax.random.normal(k_x, (batch, input_dim), jnp.float32)
    # eps of reparameterize (torch.randn_like) precomputed deterministically.
    eps = jax.random.normal(k_eps, (batch, z_dim), jnp.float32)

    recon, mu, logvar = continuous_residual_vae_forward(x, eps, packed)
    jax.block_until_ready((recon, mu, logvar))

    # Pure-JAX reference check of the same math (unfused form).
    r_recon, r_mu, r_logvar = _vae_reference(x, eps, raw)
    np.testing.assert_allclose(np.asarray(recon), np.asarray(r_recon),
                               rtol=1e-3, atol=1e-3)
    np.testing.assert_allclose(np.asarray(mu), np.asarray(r_mu),
                               rtol=1e-3, atol=1e-3)
    np.testing.assert_allclose(np.asarray(logvar), np.asarray(r_logvar),
                               rtol=1e-3, atol=1e-3)

    # TODO(synk): loss_function / get_model_inference_z are not part of
    # forward(); only forward() (encode -> reparameterize -> decode) is
    # implemented.
    print("KERNEL_OK")
</pallas_src>

<mosaic_0001>
module attributes {stable_mosaic.version = 11 : i64} {
  func.func @kernel(%arg0: memref<32x128xf32, #tpu.memory_space<vmem>>, %arg1: memref<16x128xf32, #tpu.memory_space<vmem>>, %arg2: memref<7x64x32xf32, #tpu.memory_space<vmem>>, %arg3: memref<17x64x128xf32, #tpu.memory_space<vmem>>, %arg4: memref<5xf32, #tpu.memory_space<smem>>, %arg5: memref<64x128xf32, #tpu.memory_space<vmem>>) attributes {dimension_semantics = [], scalar_prefetch = 0 : i64, scratch_operands = 0 : i64, tpu.core_type = #tpu.core_type<tc>} {
    %c0 = arith.constant 0 : index
    %c0_0 = arith.constant 0 : index
    %0 = vector.load %arg0[%c0, %c0_0] : memref<32x128xf32, #tpu.memory_space<vmem>>, vector<32x128xf32>
    %c0_1 = arith.constant 0 : index
    %c0_2 = arith.constant 0 : index
    %c0_3 = arith.constant 0 : index
    %1 = vector.load %arg2[%c0_1, %c0_2, %c0_3] : memref<7x64x32xf32, #tpu.memory_space<vmem>>, vector<1x32x32xf32>
    %2 = vector.shape_cast %1 : vector<1x32x32xf32> to vector<32x32xf32>
    %cst = arith.constant dense<0.000000e+00> : vector<32x128xf32>
    %3 = tpu.matmul %2, %0, %cst {dimension_numbers = #tpu.dot_dimension_numbers<[1], [0], [0], [1], [0, 0, 1, 1], [], []>} : vector<32x32xf32>, vector<32x128xf32>, vector<32x128xf32> -> vector<32x128xf32>
    %c0_4 = arith.constant 0 : index
    %c0_5 = arith.constant 0 : index
    %c0_6 = arith.constant 0 : index
    %4 = vector.load %arg3[%c0_4, %c0_5, %c0_6] : memref<17x64x128xf32, #tpu.memory_space<vmem>>, vector<1x32x128xf32>
    %5 = vector.shape_cast %4 : vector<1x32x128xf32> to vector<32x128xf32>
    %6 = arith.addf %3, %5 : vector<32x128xf32>
    %cst_7 = arith.constant dense<0.000000e+00> : vector<32xf32>
    %7 = vector.multi_reduction <add>, %6, %cst_7 [1] : vector<32x128xf32> to vector<32xf32>
    %8 = vector.shape_cast %7 : vector<32xf32> to vector<32x1xf32>
    %cst_8 = arith.constant 1.280000e+02 : f32
    %9 = vector.broadcast %cst_8 : f32 to vector<32x1xf32>
    %10 = arith.divf %8, %9 : vector<32x1xf32>
    %11 = vector.broadcast %10 : vector<32x1xf32> to vector<32x128xf32>
    %12 = arith.subf %6, %11 : vector<32x128xf32>
    %13 = arith.mulf %12, %12 : vector<32x128xf32>
    %cst_9 = arith.constant dense<0.000000e+00> : vector<32xf32>
    %14 = vector.multi_reduction <add>, %13, %cst_9 [1] : vector<32x128xf32> to vector<32xf32>
    %15 = vector.shape_cast %14 : vector<32xf32> to vector<32x1xf32>
    %cst_10 = arith.constant 1.280000e+02 : f32
    %16 = vector.broadcast %cst_10 : f32 to vector<32x1xf32>
    %17 = arith.divf %15, %16 : vector<32x1xf32>
    %cst_11 = arith.constant 9.99999974E-6 : f32
    %18 = vector.broadcast %cst_11 : f32 to vector<32x1xf32>
    %19 = arith.addf %17, %18 : vector<32x1xf32>
    %20 = math.rsqrt %19 : vector<32x1xf32>
    %21 = vector.broadcast %20 : vector<32x1xf32> to vector<32x128xf32>
    %22 = arith.mulf %12, %21 : vector<32x128xf32>
    %c1 = arith.constant 1 : index
    %c0_12 = arith.constant 0 : index
    %c0_13 = arith.constant 0 : index
    %23 = vector.load %arg3[%c1, %c0_12, %c0_13] : memref<17x64x128xf32, #tpu.memory_space<vmem>>, vector<1x32x128xf32>
    %24 = vector.shape_cast %23 : vector<1x32x128xf32> to vector<32x128xf32>
    %25 = arith.mulf %22, %24 : vector<32x128xf32>
    %c2 = arith.constant 2 : index
    %c0_14 = arith.constant 0 : index
    %c0_15 = arith.constant 0 : index
    %26 = vector.load %arg3[%c2, %c0_14, %c0_15] : memref<17x64x128xf32, #tpu.memory_space<vmem>>, vector<1x32x128xf32>
    %27 = vector.shape_cast %26 : vector<1x32x128xf32> to vector<32x128xf32>
    %28 = arith.addf %25, %27 : vector<32x128xf32>
    %c0_16 = arith.constant 0 : index
    %29 = memref.load %arg4[%c0_16] : memref<5xf32, #tpu.memory_space<smem>>
    %30 = vector.broadcast %29 : f32 to vector<32x128xf32>
    %31 = arith.mulf %30, %28 : vector<32x128xf32>
    %32 = arith.negf %31 : vector<32x128xf32>
    %33 = math.exp %32 : vector<32x128xf32>
    %cst_17 = arith.constant 1.000000e+00 : f32
    %34 = vector.broadcast %cst_17 : f32 to vector<32x128xf32>
    %35 = arith.addf %34, %33 : vector<32x128xf32>
    %36 = arith.divf %34, %35 : vector<32x128xf32>
    %37 = arith.mulf %28, %36 : vector<32x128xf32>
    %38 = arith.addf %37, %0 : vector<32x128xf32>
    %c1_18 = arith.constant 1 : index
    %c0_19 = arith.constant 0 : index
    %c0_20 = arith.constant 0 : index
    %39 = vector.load %arg2[%c1_18, %c0_19, %c0_20] : memref<7x64x32xf32, #tpu.memory_space<vmem>>, vector<1x32x32xf32>
    %40 = vector.shape_cast %39 : vector<1x32x32xf32> to vector<32x32xf32>
    %cst_21 = arith.constant dense<0.000000e+00> : vector<32x128xf32>
    %41 = tpu.matmul %40, %38, %cst_21 {dimension_numbers = #tpu.dot_dimension_numbers<[1], [0], [0], [1], [0, 0, 1, 1], [], []>} : vector<32x32xf32>, vector<32x128xf32>, vector<32x128xf32> -> vector<32x128xf32>
    %c3 = arith.constant 3 : index
    %c0_22 = arith.constant 0 : index
    %c0_23 = arith.constant 0 : index
    %42 = vector.load %arg3[%c3, %c0_22, %c0_23] : memref<17x64x128xf32, #tpu.memory_space<vmem>>, vector<1x32x128xf32>
    %43 = vector.shape_cast %42 : vector<1x32x128xf32> to vector<32x128xf32>
    %44 = arith.addf %41, %43 : vector<32x128xf32>
    %cst_24 = arith.constant dense<0.000000e+00> : vector<32xf32>
    %45 = vector.multi_reduction <add>, %44, %cst_24 [1] : vector<32x128xf32> to vector<32xf32>
    %46 = vector.shape_cast %45 : vector<32xf32> to vector<32x1xf32>
    %cst_25 = arith.constant 1.280000e+02 : f32
    %47 = vector.broadcast %cst_25 : f32 to vector<32x1xf32>
    %48 = arith.divf %46, %47 : vector<32x1xf32>
    %49 = vector.broadcast %48 : vector<32x1xf32> to vector<32x128xf32>
    %50 = arith.subf %44, %49 : vector<32x128xf32>
    %51 = arith.mulf %50, %50 : vector<32x128xf32>
    %cst_26 = arith.constant dense<0.000000e+00> : vector<32xf32>
    %52 = vector.multi_reduction <add>, %51, %cst_26 [1] : vector<32x128xf32> to vector<32xf32>
    %53 = vector.shape_cast %52 : vector<32xf32> to vector<32x1xf32>
    %cst_27 = arith.constant 1.280000e+02 : f32
    %54 = vector.broadcast %cst_27 : f32 to vector<32x1xf32>
    %55 = arith.divf %53, %54 : vector<32x1xf32>
    %cst_28 = arith.constant 9.99999974E-6 : f32
    %56 = vector.broadcast %cst_28 : f32 to vector<32x1xf32>
    %57 = arith.addf %55, %56 : vector<32x1xf32>
    %58 = math.rsqrt %57 : vector<32x1xf32>
    %59 = vector.broadcast %58 : vector<32x1xf32> to vector<32x128xf32>
    %60 = arith.mulf %50, %59 : vector<32x128xf32>
    %c4 = arith.constant 4 : index
    %c0_29 = arith.constant 0 : index
    %c0_30 = arith.constant 0 : index
    %61 = vector.load %arg3[%c4, %c0_29, %c0_30] : memref<17x64x128xf32, #tpu.memory_space<vmem>>, vector<1x32x128xf32>
    %62 = vector.shape_cast %61 : vector<1x32x128xf32> to vector<32x128xf32>
    %63 = arith.mulf %60, %62 : vector<32x128xf32>
    %c5 = arith.constant 5 : index
    %c0_31 = arith.constant 0 : index
    %c0_32 = arith.constant 0 : index
    %64 = vector.load %arg3[%c5, %c0_31, %c0_32] : memref<17x64x128xf32, #tpu.memory_space<vmem>>, vector<1x32x128xf32>
    %65 = vector.shape_cast %64 : vector<1x32x128xf32> to vector<32x128xf32>
    %66 = arith.addf %63, %65 : vector<32x128xf32>
    %c1_33 = arith.constant 1 : index
    %67 = memref.load %arg4[%c1_33] : memref<5xf32, #tpu.memory_space<smem>>
    %68 = vector.broadcast %67 : f32 to vector<32x128xf32>
    %69 = arith.mulf %68, %66 : vector<32x128xf32>
    %70 = arith.negf %69 : vector<32x128xf32>
    %71 = math.exp %70 : vector<32x128xf32>
    %cst_34 = arith.constant 1.000000e+00 : f32
    %72 = vector.broadcast %cst_34 : f32 to vector<32x128xf32>
    %73 = arith.addf %72, %71 : vector<32x128xf32>
    %74 = arith.divf %72, %73 : vector<32x128xf32>
    %75 = arith.mulf %66, %74 : vector<32x128xf32>
    %76 = arith.addf %75, %38 : vector<32x128xf32>
    %c2_35 = arith.constant 2 : index
    %c0_36 = arith.constant 0 : index
    %c0_37 = arith.constant 0 : index
    %77 = vector.load %arg2[%c2_35, %c0_36, %c0_37] : memref<7x64x32xf32, #tpu.memory_space<vmem>>, vector<1x32x32xf32>
    %78 = vector.shape_cast %77 : vector<1x32x32xf32> to vector<32x32xf32>
    %cst_38 = arith.constant dense<0.000000e+00> : vector<32x128xf32>
    %79 = tpu.matmul %78, %76, %cst_38 {dimension_numbers = #tpu.dot_dimension_numbers<[1], [0], [0], [1], [0, 0, 1, 1], [], []>} : vector<32x32xf32>, vector<32x128xf32>, vector<32x128xf32> -> vector<32x128xf32>
    %c6 = arith.constant 6 : index
    %c0_39 = arith.constant 0 : index
    %c0_40 = arith.constant 0 : index
    %80 = vector.load %arg3[%c6, %c0_39, %c0_40] : memref<17x64x128xf32, #tpu.memory_space<vmem>>, vector<1x32x128xf32>
    %81 = vector.shape_cast %80 : vector<1x32x128xf32> to vector<32x128xf32>
    %82 = arith.addf %79, %81 : vector<32x128xf32>
    %cst_41 = arith.constant dense<0.000000e+00> : vector<32xf32>
    %83 = vector.multi_reduction <add>, %82, %cst_41 [1] : vector<32x128xf32> to vector<32xf32>
    %84 = vector.shape_cast %83 : vector<32xf32> to vector<32x1xf32>
    %cst_42 = arith.constant 1.280000e+02 : f32
    %85 = vector.broadcast %cst_42 : f32 to vector<32x1xf32>
    %86 = arith.divf %84, %85 : vector<32x1xf32>
    %87 = vector.broadcast %86 : vector<32x1xf32> to vector<32x128xf32>
    %88 = arith.subf %82, %87 : vector<32x128xf32>
    %89 = arith.mulf %88, %88 : vector<32x128xf32>
    %cst_43 = arith.constant dense<0.000000e+00> : vector<32xf32>
    %90 = vector.multi_reduction <add>, %89, %cst_43 [1] : vector<32x128xf32> to vector<32xf32>
    %91 = vector.shape_cast %90 : vector<32xf32> to vector<32x1xf32>
    %cst_44 = arith.constant 1.280000e+02 : f32
    %92 = vector.broadcast %cst_44 : f32 to vector<32x1xf32>
    %93 = arith.divf %91, %92 : vector<32x1xf32>
    %cst_45 = arith.constant 9.99999974E-6 : f32
    %94 = vector.broadcast %cst_45 : f32 to vector<32x1xf32>
    %95 = arith.addf %93, %94 : vector<32x1xf32>
    %96 = math.rsqrt %95 : vector<32x1xf32>
    %97 = vector.broadcast %96 : vector<32x1xf32> to vector<32x128xf32>
    %98 = arith.mulf %88, %97 : vector<32x128xf32>
    %c7 = arith.constant 7 : index
    %c0_46 = arith.constant 0 : index
    %c0_47 = arith.constant 0 : index
    %99 = vector.load %arg3[%c7, %c0_46, %c0_47] : memref<17x64x128xf32, #tpu.memory_space<vmem>>, vector<1x32x128xf32>
    %100 = vector.shape_cast %99 : vector<1x32x128xf32> to vector<32x128xf32>
    %101 = arith.mulf %98, %100 : vector<32x128xf32>
    %c8 = arith.constant 8 : index
    %c0_48 = arith.constant 0 : index
    %c0_49 = arith.constant 0 : index
    %102 = vector.load %arg3[%c8, %c0_48, %c0_49] : memref<17x64x128xf32, #tpu.memory_space<vmem>>, vector<1x32x128xf32>
    %103 = vector.shape_cast %102 : vector<1x32x128xf32> to vector<32x128xf32>
    %104 = arith.addf %101, %103 : vector<32x128xf32>
    %c2_50 = arith.constant 2 : index
    %105 = memref.load %arg4[%c2_50] : memref<5xf32, #tpu.memory_space<smem>>
    %106 = vector.broadcast %105 : f32 to vector<32x128xf32>
    %107 = arith.mulf %106, %104 : vector<32x128xf32>
    %108 = arith.negf %107 : vector<32x128xf32>
    %109 = math.exp %108 : vector<32x128xf32>
    %cst_51 = arith.constant 1.000000e+00 : f32
    %110 = vector.broadcast %cst_51 : f32 to vector<32x128xf32>
    %111 = arith.addf %110, %109 : vector<32x128xf32>
    %112 = arith.divf %110, %111 : vector<32x128xf32>
    %113 = arith.mulf %104, %112 : vector<32x128xf32>
    %114 = arith.addf %113, %76 : vector<32x128xf32>
    %c3_52 = arith.constant 3 : index
    %c0_53 = arith.constant 0 : index
    %c0_54 = arith.constant 0 : index
    %115 = vector.load %arg2[%c3_52, %c0_53, %c0_54] : memref<7x64x32xf32, #tpu.memory_space<vmem>>, vector<1x32x32xf32>
    %116 = vector.shape_cast %115 : vector<1x32x32xf32> to vector<32x32xf32>
    %cst_55 = arith.constant dense<0.000000e+00> : vector<32x128xf32>
    %117 = tpu.matmul %116, %114, %cst_55 {dimension_numbers = #tpu.dot_dimension_numbers<[1], [0], [0], [1], [0, 0, 1, 1], [], []>} : vector<32x32xf32>, vector<32x128xf32>, vector<32x128xf32> -> vector<32x128xf32>
    %c9 = arith.constant 9 : index
    %c0_56 = arith.constant 0 : index
    %c0_57 = arith.constant 0 : index
    %118 = vector.load %arg3[%c9, %c0_56, %c0_57] : memref<17x64x128xf32, #tpu.memory_space<vmem>>, vector<1x32x128xf32>
    %119 = vector.shape_cast %118 : vector<1x32x128xf32> to vector<32x128xf32>
    %120 = arith.addf %117, %119 : vector<32x128xf32>
    %121 = vector.extract_strided_slice %120 {offsets = [0, 0], sizes = [16, 128], strides = [1, 1]} : vector<32x128xf32> to vector<16x128xf32>
    %122 = vector.extract_strided_slice %120 {offsets = [16, 0], sizes = [16, 128], strides = [1, 1]} : vector<32x128xf32> to vector<16x128xf32>
    %c0_58 = arith.constant 0 : index
    %c0_59 = arith.constant 0 : index
    %123 = vector.load %arg1[%c0_58, %c0_59] : memref<16x128xf32, #tpu.memory_space<vmem>>, vector<16x128xf32>
    %cst_60 = arith.constant 5.000000e-01 : f32
    %124 = vector.broadcast %cst_60 : f32 to vector<16x128xf32>
    %125 = arith.mulf %124, %122 : vector<16x128xf32>
    %126 = math.exp %125 : vector<16x128xf32>
    %127 = arith.mulf %123, %126 : vector<16x128xf32>
    %128 = arith.addf %121, %127 : vector<16x128xf32>
    %c4_61 = arith.constant 4 : index
    %c0_62 = arith.constant 0 : index
    %c0_63 = arith.constant 0 : index
    %129 = vector.load %arg2[%c4_61, %c0_62, %c0_63] : memref<7x64x32xf32, #tpu.memory_space<vmem>>, vector<1x64x32xf32>
    %130 = vector.shape_cast %129 : vector<1x64x32xf32> to vector<64x32xf32>
    %cst_64 = arith.constant 0.000000e+00 : f32
    %131 = vector.broadcast %cst_64 : f32 to vector<16x128xf32>
    %132 = tpu.concatenate %128, %131 in 0 : vector<16x128xf32>, vector<16x128xf32> -> vector<32x128xf32>
    %cst_65 = arith.constant dense<0.000000e+00> : vector<64x128xf32>
    %133 = tpu.matmul %130, %132, %cst_65 {dimension_numbers = #tpu.dot_dimension_numbers<[1], [0], [0], [1], [0, 0, 1, 1], [], []>} : vector<64x32xf32>, vector<32x128xf32>, vector<64x128xf32> -> vector<64x128xf32>
    %c10 = arith.constant 10 : index
    %c0_66 = arith.constant 0 : index
    %c0_67 = arith.constant 0 : index
    %134 = vector.load %arg3[%c10, %c0_66, %c0_67] : memref<17x64x128xf32, #tpu.memory_space<vmem>>, vector<1x64x128xf32>
    %135 = vector.shape_cast %134 : vector<1x64x128xf32> to vector<64x128xf32>
    %136 = arith.addf %133, %135 : vector<64x128xf32>
    %137 = vector.extract_strided_slice %136 {offsets = [0, 0], sizes = [32, 128], strides = [1, 1]} : vector<64x128xf32> to vector<32x128xf32>
    %138 = vector.extract_strided_slice %136 {offsets = [32, 0], sizes = [32, 128], strides = [1, 1]} : vector<64x128xf32> to vector<32x128xf32>
    %cst_68 = arith.constant dense<0.000000e+00> : vector<32xf32>
    %139 = vector.multi_reduction <add>, %137, %cst_68 [1] : vector<32x128xf32> to vector<32xf32>
    %140 = vector.shape_cast %139 : vector<32xf32> to vector<32x1xf32>
    %cst_69 = arith.constant 1.280000e+02 : f32
    %141 = vector.broadcast %cst_69 : f32 to vector<32x1xf32>
    %142 = arith.divf %140, %141 : vector<32x1xf32>
    %143 = vector.broadcast %142 : vector<32x1xf32> to vector<32x128xf32>
    %144 = arith.subf %137, %143 : vector<32x128xf32>
    %145 = arith.mulf %144, %144 : vector<32x128xf32>
    %cst_70 = arith.constant dense<0.000000e+00> : vector<32xf32>
    %146 = vector.multi_reduction <add>, %145, %cst_70 [1] : vector<32x128xf32> to vector<32xf32>
    %147 = vector.shape_cast %146 : vector<32xf32> to vector<32x1xf32>
    %cst_71 = arith.constant 1.280000e+02 : f32
    %148 = vector.broadcast %cst_71 : f32 to vector<32x1xf32>
    %149 = arith.divf %147, %148 : vector<32x1xf32>
    %cst_72 = arith.constant 9.99999974E-6 : f32
    %150 = vector.broadcast %cst_72 : f32 to vector<32x1xf32>
    %151 = arith.addf %149, %150 : vector<32x1xf32>
    %152 = math.rsqrt %151 : vector<32x1xf32>
    %153 = vector.broadcast %152 : vector<32x1xf32> to vector<32x128xf32>
    %154 = arith.mulf %144, %153 : vector<32x128xf32>
    %c11 = arith.constant 11 : index
    %c0_73 = arith.constant 0 : index
    %c0_74 = arith.constant 0 : index
    %155 = vector.load %arg3[%c11, %c0_73, %c0_74] : memref<17x64x128xf32, #tpu.memory_space<vmem>>, vector<1x32x128xf32>
    %156 = vector.shape_cast %155 : vector<1x32x128xf32> to vector<32x128xf32>
    %157 = arith.mulf %154, %156 : vector<32x128xf32>
    %c12 = arith.constant 12 : index
    %c0_75 = arith.constant 0 : index
    %c0_76 = arith.constant 0 : index
    %158 = vector.load %arg3[%c12, %c0_75, %c0_76] : memref<17x64x128xf32, #tpu.memory_space<vmem>>, vector<1x32x128xf32>
    %159 = vector.shape_cast %158 : vector<1x32x128xf32> to vector<32x128xf32>
    %160 = arith.addf %157, %159 : vector<32x128xf32>
    %c3_77 = arith.constant 3 : index
    %161 = memref.load %arg4[%c3_77] : memref<5xf32, #tpu.memory_space<smem>>
    %162 = vector.broadcast %161 : f32 to vector<32x128xf32>
    %163 = arith.mulf %162, %160 : vector<32x128xf32>
    %164 = arith.negf %163 : vector<32x128xf32>
    %165 = math.exp %164 : vector<32x128xf32>
    %cst_78 = arith.constant 1.000000e+00 : f32
    %166 = vector.broadcast %cst_78 : f32 to vector<32x128xf32>
    %167 = arith.addf %166, %165 : vector<32x128xf32>
    %168 = arith.divf %166, %167 : vector<32x128xf32>
    %169 = arith.mulf %160, %168 : vector<32x128xf32>
    %170 = arith.addf %169, %138 : vector<32x128xf32>
    %c5_79 = arith.constant 5 : index
    %c0_80 = arith.constant 0 : index
    %c0_81 = arith.constant 0 : index
    %171 = vector.load %arg2[%c5_79, %c0_80, %c0_81] : memref<7x64x32xf32, #tpu.memory_space<vmem>>, vector<1x32x32xf32>
    %172 = vector.shape_cast %171 : vector<1x32x32xf32> to vector<32x32xf32>
    %cst_82 = arith.constant dense<0.000000e+00> : vector<32x128xf32>
    %173 = tpu.matmul %172, %170, %cst_82 {dimension_numbers = #tpu.dot_dimension_numbers<[1], [0], [0], [1], [0, 0, 1, 1], [], []>} : vector<32x32xf32>, vector<32x128xf32>, vector<32x128xf32> -> vector<32x128xf32>
    %c13 = arith.constant 13 : index
    %c0_83 = arith.constant 0 : index
    %c0_84 = arith.constant 0 : index
    %174 = vector.load %arg3[%c13, %c0_83, %c0_84] : memref<17x64x128xf32, #tpu.memory_space<vmem>>, vector<1x32x128xf32>
    %175 = vector.shape_cast %174 : vector<1x32x128xf32> to vector<32x128xf32>
    %176 = arith.addf %173, %175 : vector<32x128xf32>
    %cst_85 = arith.constant dense<0.000000e+00> : vector<32xf32>
    %177 = vector.multi_reduction <add>, %176, %cst_85 [1] : vector<32x128xf32> to vector<32xf32>
    %178 = vector.shape_cast %177 : vector<32xf32> to vector<32x1xf32>
    %cst_86 = arith.constant 1.280000e+02 : f32
    %179 = vector.broadcast %cst_86 : f32 to vector<32x1xf32>
    %180 = arith.divf %178, %179 : vector<32x1xf32>
    %181 = vector.broadcast %180 : vector<32x1xf32> to vector<32x128xf32>
    %182 = arith.subf %176, %181 : vector<32x128xf32>
    %183 = arith.mulf %182, %182 : vector<32x128xf32>
    %cst_87 = arith.constant dense<0.000000e+00> : vector<32xf32>
    %184 = vector.multi_reduction <add>, %183, %cst_87 [1] : vector<32x128xf32> to vector<32xf32>
    %185 = vector.shape_cast %184 : vector<32xf32> to vector<32x1xf32>
    %cst_88 = arith.constant 1.280000e+02 : f32
    %186 = vector.broadcast %cst_88 : f32 to vector<32x1xf32>
    %187 = arith.divf %185, %186 : vector<32x1xf32>
    %cst_89 = arith.constant 9.99999974E-6 : f32
    %188 = vector.broadcast %cst_89 : f32 to vector<32x1xf32>
    %189 = arith.addf %187, %188 : vector<32x1xf32>
    %190 = math.rsqrt %189 : vector<32x1xf32>
    %191 = vector.broadcast %190 : vector<32x1xf32> to vector<32x128xf32>
    %192 = arith.mulf %182, %191 : vector<32x128xf32>
    %c14 = arith.constant 14 : index
    %c0_90 = arith.constant 0 : index
    %c0_91 = arith.constant 0 : index
    %193 = vector.load %arg3[%c14, %c0_90, %c0_91] : memref<17x64x128xf32, #tpu.memory_space<vmem>>, vector<1x32x128xf32>
    %194 = vector.shape_cast %193 : vector<1x32x128xf32> to vector<32x128xf32>
    %195 = arith.mulf %192, %194 : vector<32x128xf32>
    %c15 = arith.constant 15 : index
    %c0_92 = arith.constant 0 : index
    %c0_93 = arith.constant 0 : index
    %196 = vector.load %arg3[%c15, %c0_92, %c0_93] : memref<17x64x128xf32, #tpu.memory_space<vmem>>, vector<1x32x128xf32>
    %197 = vector.shape_cast %196 : vector<1x32x128xf32> to vector<32x128xf32>
    %198 = arith.addf %195, %197 : vector<32x128xf32>
    %c4_94 = arith.constant 4 : index
    %199 = memref.load %arg4[%c4_94] : memref<5xf32, #tpu.memory_space<smem>>
    %200 = vector.broadcast %199 : f32 to vector<32x128xf32>
    %201 = arith.mulf %200, %198 : vector<32x128xf32>
    %202 = arith.negf %201 : vector<32x128xf32>
    %203 = math.exp %202 : vector<32x128xf32>
    %cst_95 = arith.constant 1.000000e+00 : f32
    %204 = vector.broadcast %cst_95 : f32 to vector<32x128xf32>
    %205 = arith.addf %204, %203 : vector<32x128xf32>
    %206 = arith.divf %204, %205 : vector<32x128xf32>
    %207 = arith.mulf %198, %206 : vector<32x128xf32>
    %208 = arith.addf %207, %170 : vector<32x128xf32>
    %c6_96 = arith.constant 6 : index
    %c0_97 = arith.constant 0 : index
    %c0_98 = arith.constant 0 : index
    %209 = vector.load %arg2[%c6_96, %c0_97, %c0_98] : memref<7x64x32xf32, #tpu.memory_space<vmem>>, vector<1x32x32xf32>
    %210 = vector.shape_cast %209 : vector<1x32x32xf32> to vector<32x32xf32>
    %cst_99 = arith.constant dense<0.000000e+00> : vector<32x128xf32>
    %211 = tpu.matmul %210, %208, %cst_99 {dimension_numbers = #tpu.dot_dimension_numbers<[1], [0], [0], [1], [0, 0, 1, 1], [], []>} : vector<32x32xf32>, vector<32x128xf32>, vector<32x128xf32> -> vector<32x128xf32>
    %c16 = arith.constant 16 : index
    %c0_100 = arith.constant 0 : index
    %c0_101 = arith.constant 0 : index
    %212 = vector.load %arg3[%c16, %c0_100, %c0_101] : memref<17x64x128xf32, #tpu.memory_space<vmem>>, vector<1x32x128xf32>
    %213 = vector.shape_cast %212 : vector<1x32x128xf32> to vector<32x128xf32>
    %214 = arith.addf %211, %213 : vector<32x128xf32>
    %c0_102 = arith.constant 0 : index
    %c0_103 = arith.constant 0 : index
    %215 = vector.load %arg5[%c0_102, %c0_103] : memref<64x128xf32, #tpu.memory_space<vmem>>, vector<32x128xf32>
    tpu.vector_store %arg5[%c0_102, %c0_103], %214 {strides = array<i32>} : memref<64x128xf32, #tpu.memory_space<vmem>>, vector<32x128xf32>,
    %c32 = arith.constant 32 : index
    %c0_104 = arith.constant 0 : index
    %216 = vector.load %arg5[%c32, %c0_104] : memref<64x128xf32, #tpu.memory_space<vmem>>, vector<32x128xf32>
    tpu.vector_store %arg5[%c32, %c0_104], %120 {strides = array<i32>} : memref<64x128xf32, #tpu.memory_space<vmem>>, vector<32x128xf32>,
    return
  }
}

</mosaic_0001>

<llo_original>
// kernel: tpu_custom_call.1
$region0: #{tpu_custom_call.1}
  #allocation0 [shape = 'u32[]', space=smem, size = 0x4, offset = 0x4, fixed_abs, tag = 'smem constant byte address 0x4 - core index']
  #allocation1 [shape = 'u32[144,128]{1,0:T(1,128)}', space=vmem, size = 0x12000, scoped, tag = 'internal scratch']
  %s0 = inlined_call_operand.vmem [shape: f32[32,128], index: 0, kind: input, shape index: {}]
  %s1 = inlined_call_operand.vmem [shape: f32[16,128], index: 1, kind: input, shape index: {}]
  %s2 = inlined_call_operand.vmem [shape: f32[7,64,32], index: 2, kind: input, shape index: {}]
  %s3 = inlined_call_operand.hbm [shape: f32[17,64,128], index: 3, kind: input, shape index: {}]
  %s4 = inlined_call_operand.vmem [shape: f32[5], index: 4, kind: input, shape index: {}]
  %s5 = inlined_call_operand.hbm [shape: f32[64,128], index: 5, kind: output, shape index: {}]
  %s6 = sld [smem:[#allocation0]]
  $region38: #{tpu_custom_call.1} parent=0
    _
  %s8 = ssub.s32 1, %s6
  %s9 = scalar_select 0, %s8, %s6
  $region1: #{tpu_custom_call.1} parent=0
    #allocation2 [shape = 'u8[557056]{0}', space=vmem, size = 0x88000, scoped, tag = 'input window, operand 3, single buffered']
    #allocation3 [shape = 's32[1]{0}', space=sflag, size = 0x4, scoped, tag = 'scoped memory for tpu_custom_call.1']
    #allocation4 [shape = 's32[1]{0}', space=sflag, size = 0x4, scoped, tag = 'scoped memory for tpu_custom_call.1']
    #allocation5 [shape = 's32[1]{0}', space=sflag, size = 0x4, scoped, tag = 'scoped memory for tpu_custom_call.1']
    #allocation6 [shape = 'u8[512]{0}', space=smem, size = 0x200, scoped, tag = 'input window, operand 4, single buffered']
    #allocation7 [shape = 'u8[32768]{0}', space=vmem, size = 0x8000, scoped, tag = 'output window, operand 0, single buffered']
    %10 = vsyncpa [#allocation3], 0
    %11 = vsyncpa [#allocation5], 0
    %12 = vsyncpa [#allocation4], 0
    // Predicated region
    $region2: #{tpu_custom_call.1} parent=1 // pred_check
      _
    $region3: #{tpu_custom_call.1} parent=1 // pred_check_branch
      %14 = sbr.rel (0) target = $region5
    $region4: #{tpu_custom_call.1} parent=1 // pred_region
      _
    $region5: #{tpu_custom_call.1} parent=1 // pred_fallthru
      _
    // Predicated region
    $region6: #{tpu_custom_call.1} parent=1 // pred_check
      _
    $region7: #{tpu_custom_call.1} parent=1 // pred_check_branch
      %16 = sbr.rel (0) target = $region9
    $region8: #{tpu_custom_call.1} parent=1 // pred_region
      _
    $region9: #{tpu_custom_call.1} parent=1 // pred_fallthru
      _
    // Predicated region
    $region10: #{tpu_custom_call.1} parent=1 // pred_check
      _
    $region11: #{tpu_custom_call.1} parent=1 // pred_check_branch
      %18 = sbr.rel (0) target = $region13
    $region12: #{tpu_custom_call.1} parent=1 // pred_region
      _
    $region13: #{tpu_custom_call.1} parent=1 // pred_fallthru
      _
    // Predicated region
    $region14: #{tpu_custom_call.1} parent=1 // pred_check
      _
    $region15: #{tpu_custom_call.1} parent=1 // pred_check_branch
      %20 = sbr.rel (0) target = $region17
    $region16: #{tpu_custom_call.1} parent=1 // pred_region
      %s22 = ssub.s32 17408, 17408
      %23 = vsyncadd [#allocation3], %s22
      %s24 = sshll.u32 [#allocation2], 4
      %s25 = int_to_ptr.vmem [resolvable:$true] %s24
      %30 = dma.hbm_to_vmem [thread:$0]  %s3, 17408, %s25, [#allocation3], 128, 128, 8
    $region17: #{tpu_custom_call.1} parent=1 // pred_fallthru
      _
    // Predicated region
    $region18: #{tpu_custom_call.1} parent=1 // pred_check
      _
    $region19: #{tpu_custom_call.1} parent=1 // pred_check_branch
      %32 = sbr.rel (0) target = $region21
    $region20: #{tpu_custom_call.1} parent=1 // pred_region
      %s34 = ssub.s32 16, 16
      %35 = vsyncadd [#allocation5], %s34
      %s37 = sshll.u32 %s4, 4
      %s38 = int_to_ptr.vmem [resolvable:$true] %s37
      %40 = dma.vmem_to_smem %s38, 16, [#allocation6], [#allocation5]
    $region21: #{tpu_custom_call.1} parent=1 // pred_fallthru
      _
    // Predicated region
    $region22: #{tpu_custom_call.1} parent=1 // pred_check
      _
    $region23: #{tpu_custom_call.1} parent=1 // pred_check_branch
      %42 = sbr.rel (0) target = $region25
    $region24: #{tpu_custom_call.1} parent=1 // pred_region
      %43 = dma.done [#allocation3], 17408
    $region25: #{tpu_custom_call.1} parent=1 // pred_fallthru
      _
    // Predicated region
    $region26: #{tpu_custom_call.1} parent=1 // pred_check
      _
    $region27: #{tpu_custom_call.1} parent=1 // pred_check_branch
      %45 = sbr.rel (0) target = $region29
    $region28: #{tpu_custom_call.1} parent=1 // pred_region
      %46 = dma.done [#allocation5], 16
    $region29: #{tpu_custom_call.1} parent=1 // pred_fallthru
      _
    %47 = sfence
    %v48 = vld [vmem:[%s0] sm:$0xff]
    %v49 = vld [vmem:[%s0 + $0x8] sm:$0xff]
    %v50 = vld [vmem:[%s0 + $0x10] sm:$0xff]
    %v51 = vld [vmem:[%s0 + $0x18] sm:$0xff]
    %v52 = vld [vmem:[%s2] sm:$0xff]
    %v53 = vld [vmem:[%s2 + $0x8] sm:$0xff]
    %v54 = vld [vmem:[%s2 + $0x10] sm:$0xff]
    %v55 = vld [vmem:[%s2 + $0x18] sm:$0xff]
    %v56 = vld [vmem:[#allocation2] sm:$0xff]
    %v57 = vld [vmem:[#allocation2 + $0x8] sm:$0xff]
    %v58 = vld [vmem:[#allocation2 + $0x10] sm:$0xff]
    %v59 = vld [vmem:[#allocation2 + $0x18] sm:$0xff]
    %vm60 = vcmask 261120
    %v62 = vsel %vm60, %v52, 0
    %v65 = vsel %vm60, %v53, 0
    %v68 = vsel %vm60, %v54, 0
    %v71 = vsel %vm60, %v55, 0
    %73 = vmatprep.subr.mxu0 0.0
    %74 = vmatpush1.msra.mxu0 %v48
    %75 = vmatprep.subr.mxu0 0.0
    %76 = vmatpush1.msra.mxu0 %v49
    %77 = vmatprep.subr.mxu0 0.0
    %78 = vmatpush1.msra.mxu0 %v50
    %79 = vmatprep.subr.mxu0 0.0
    %80 = vmatpush1.msra.mxu0 %v51
    %81 = vmatprep.subr.mxu0 0.0
    %82 = vmatpush1.msra.mxu0 0.0
    %83 = vmatprep.subr.mxu0 0.0
    %84 = vmatpush1.msra.mxu0 0.0
    %85 = vmatprep.subr.mxu0 0.0
    %86 = vmatpush1.msra.mxu0 0.0
    %87 = vmatprep.subr.mxu0 0.0
    %88 = vmatpush1.msra.mxu0 0.0
    %89 = vmatprep.subr.mxu0 0.0
    %90 = vmatpush1.msra.mxu0 0.0
    %91 = vmatprep.subr.mxu0 0.0
    %92 = vmatpush1.msra.mxu0 0.0
    %93 = vmatprep.subr.mxu0 0.0
    %94 = vmatpush1.msra.mxu0 0.0
    %95 = vmatprep.subr.mxu0 0.0
    %96 = vmatpush1.msra.mxu0 0.0
    %97 = vmatprep.subr.mxu0 0.0
    %98 = vmatpush1.msra.mxu0 0.0
    %99 = vmatprep.subr.mxu0 0.0
    %100 = vmatpush1.msra.mxu0 0.0
    %101 = vmatprep.subr.mxu0 0.0
    %102 = vmatpush1.msra.mxu0 0.0
    %103 = vmatprep.subr.mxu0 0.0
    %104 = vmatpush1.msra.mxu0 0.0
    %105 = vmatprep.subr.mxu0 0.0
    %106 = vmatpush1.msra.mxu0 0.0
    %107 = vmatprep.subr.mxu0 0.0
    %108 = vmatpush1.msra.mxu0 0.0
    %109 = vmatprep.subr.mxu0 0.0
    %110 = vmatpush1.msra.mxu0 0.0
    %111 = vmatprep.subr.mxu0 0.0
    %112 = vmatpush1.msra.mxu0 0.0
    %113 = vmatprep.subr.mxu0 0.0
    %114 = vmatpush1.msra.mxu0 0.0
    %115 = vmatprep.subr.mxu0 0.0
    %116 = vmatpush1.msra.mxu0 0.0
    %117 = vmatprep.subr.mxu0 0.0
    %118 = vmatpush1.msra.mxu0 0.0
    %119 = vmatprep.subr.mxu0 0.0
    %120 = vmatpush1.msra.mxu0 0.0
    %121 = vmatprep.subr.mxu0 0.0
    %122 = vmatpush1.msra.mxu0 0.0
    %123 = vmatprep.subr.mxu0 0.0
    %124 = vmatpush1.msra.mxu0 0.0
    %125 = vmatprep.subr.mxu0 0.0
    %126 = vmatpush1.msra.mxu0 0.0
    %127 = vmatprep.subr.mxu0 0.0
    %128 = vmatpush1.msra.mxu0 0.0
    %129 = vmatprep.subr.mxu0 0.0
    %130 = vmatpush1.msra.mxu0 0.0
    %131 = vmatprep.subr.mxu0 0.0
    %132 = vmatpush1.msra.mxu0 0.0
    %133 = vmatprep.subr.mxu0 0.0
    %134 = vmatpush1.msra.mxu0 0.0
    %135 = vmatprep.subr.mxu0 0.0
    %136 = vmatpush1.msra.mxu0 0.0
    %137 = vmatprep.mubr.f32.mxu0 0.0
    %138 = vmatmul.mubr.f32.gmra.mrb[0].mxu0 %v62
    %v139 = vpop.f32.mrb[0].mxu0
    %v140 = vadd.f32 %v56, %v139
    %v141 = vpop.f32.mrb[0].mxu0
    %142 = vmatprep.mubr.f32.mxu0 0.0
    %143 = vmatmul.mubr.f32.gmra.mrb[0].mxu0 %v65
    %v144 = vpop.f32.mrb[0].mxu0
    %v145 = vadd.f32 %v57, %v144
    %v146 = vpop.f32.mrb[0].mxu0
    %147 = vmatprep.mubr.f32.mxu0 0.0
    %148 = vmatmul.mubr.f32.gmra.mrb[0].mxu0 %v68
    %v149 = vpop.f32.mrb[0].mxu0
    %v150 = vadd.f32 %v58, %v149
    %v151 = vpop.f32.mrb[0].mxu0
    %152 = vmatprep.mubr.f32.mxu0 0.0
    %153 = vmatmul.mubr.f32.gmra.mrb[0].mxu0 %v71
    %v154 = vpop.f32.mrb[0].mxu0
    %v155 = vadd.f32 %v59, %v154
    %v156 = vpop.f32.mrb[0].mxu0
    %157 = vdwg.mxu0
    %158 = vadd.xlane.f32.xlu0 %v140
    %v159 = vpop.xlane.xlu0 %158
    %160 = vadd.xlane.f32.xlu0 %v145
    %v161 = vpop.xlane.xlu0 %160
    %162 = vadd.xlane.f32.xlu0 %v150
    %v163 = vpop.xlane.xlu0 %162
    %164 = vadd.xlane.f32.xlu0 %v155
    %v165 = vpop.xlane.xlu0 %164
    %v166 = vrcp.pop 128.0
    %v167 = vmul.f32 %v159, %v166
    %v168 = vmul.f32 %v161, %v166
    %v169 = vmul.f32 %v163, %v166
    %v170 = vmul.f32 %v165, %v166
    %v171 = vsub.f32 %v140, %v167
    %v172 = vsub.f32 %v145, %v168
    %v173 = vsub.f32 %v150, %v169
    %v174 = vsub.f32 %v155, %v170
    %v175 = vmul.f32 %v171, %v171
    %v176 = vmul.f32 %v172, %v172
    %v177 = vmul.f32 %v173, %v173
    %v178 = vmul.f32 %v174, %v174
    %179 = vadd.xlane.f32.xlu0 %v175
    %v180 = vpop.xlane.xlu0 %179
    %181 = vadd.xlane.f32.xlu0 %v176
    %v182 = vpop.xlane.xlu0 %181
    %183 = vadd.xlane.f32.xlu0 %v177
    %v184 = vpop.xlane.xlu0 %183
    %185 = vadd.xlane.f32.xlu0 %v178
    %v186 = vpop.xlane.xlu0 %185
    %v187 = vmul.f32 %v180, %v166
    %v188 = vmul.f32 %v182, %v166
    %v189 = vmul.f32 %v184, %v166
    %v190 = vmul.f32 %v186, %v166
    %v191 = vadd.f32 %v187, 1e-05
    %v192 = vadd.f32 %v188, 1e-05
    %v193 = vadd.f32 %v189, 1e-05
    %v194 = vadd.f32 %v190, 1e-05
    %v195 = vrsqrt.pop %v191
    %v196 = vrsqrt.pop %v192
    %v197 = vrsqrt.pop %v193
    %v198 = vrsqrt.pop %v194
    %v199 = vmul.f32 %v171, %v195
    %v200 = vmul.f32 %v172, %v196
    %v201 = vmul.f32 %v173, %v197
    %v202 = vmul.f32 %v174, %v198
    %s203 = scalar_lea.vmem [#allocation2], 64
    %v204 = vld [vmem:[%s203] sm:$0xff]
    %v205 = vld [vmem:[%s203 + $0x8] sm:$0xff]
    %v206 = vld [vmem:[%s203 + $0x10] sm:$0xff]
    %v207 = vld [vmem:[%s203 + $0x18] sm:$0xff]
    %v208 = vmul.f32 %v199, %v204
    %v209 = vmul.f32 %v200, %v205
    %v210 = vmul.f32 %v201, %v206
    %v211 = vmul.f32 %v202, %v207
    %s212 = scalar_lea.vmem [#allocation2], 128
    %v213 = vld [vmem:[%s212] sm:$0xff]
    %v214 = vld [vmem:[%s212 + $0x8] sm:$0xff]
    %v215 = vld [vmem:[%s212 + $0x10] sm:$0xff]
    %v216 = vld [vmem:[%s212 + $0x18] sm:$0xff]
    %v217 = vadd.f32 %v208, %v213
    %v218 = vadd.f32 %v209, %v214
    %v219 = vadd.f32 %v210, %v215
    %v220 = vadd.f32 %v211, %v216
    %s221 = sld [smem:[#allocation6]]
    %v222 = vstv %s221
    %v223 = vmul.f32 %v222, %v217
    %v224 = vmul.f32 %v222, %v218
    %v225 = vmul.f32 %v222, %v219
    %v226 = vmul.f32 %v222, %v220
    %v227 = vxor.u32 %v223, 2147483648
    %v228 = vxor.u32 %v224, 2147483648
    %v229 = vxor.u32 %v225, 2147483648
    %v230 = vxor.u32 %v226, 2147483648
    %v231 = vmul.f32 %v227, 1.442695
    %v232 = vpow.pop %v231
    %v233 = vmul.f32 %v228, 1.442695
    %v234 = vpow.pop %v233
    %v235 = vmul.f32 %v229, 1.442695
    %v236 = vpow.pop %v235
    %v237 = vmul.f32 %v230, 1.442695
    %v238 = vpow.pop %v237
    %v239 = vadd.f32 %v232, 1.0
    %v240 = vadd.f32 %v234, 1.0
    %v241 = vadd.f32 %v236, 1.0
    %v242 = vadd.f32 %v238, 1.0
    %v243 = vrcp.pop %v239
    %v244 = vmul.f32 1.0, %v243
    %v245 = vrcp.pop %v240
    %v246 = vmul.f32 1.0, %v245
    %v247 = vrcp.pop %v241
    %v248 = vmul.f32 1.0, %v247
    %v249 = vrcp.pop %v242
    %v250 = vmul.f32 1.0, %v249
    %v251 = vmul.f32 %v217, %v244
    %v252 = vmul.f32 %v218, %v246
    %v253 = vmul.f32 %v219, %v248
    %v254 = vmul.f32 %v220, %v250
    %v255 = vadd.f32 %v251, %v48
    %v256 = vadd.f32 %v252, %v49
    %v257 = vadd.f32 %v253, %v50
    %v258 = vadd.f32 %v254, %v51
    %s259 = scalar_lea.vmem %s2, 64
    %v260 = vld [vmem:[%s259] sm:$0xff]
    %v261 = vld [vmem:[%s259 + $0x8] sm:$0xff]
    %v262 = vld [vmem:[%s259 + $0x10] sm:$0xff]
    %v263 = vld [vmem:[%s259 + $0x18] sm:$0xff]
    %s264 = scalar_lea.vmem [#allocation2], 192
    %v265 = vld [vmem:[%s264] sm:$0xff]
    %v266 = vld [vmem:[%s264 + $0x8] sm:$0xff]
    %v267 = vld [vmem:[%s264 + $0x10] sm:$0xff]
    %v268 = vld [vmem:[%s264 + $0x18] sm:$0xff]
    %v270 = vsel %vm60, %v260, 0
    %v273 = vsel %vm60, %v261, 0
    %v276 = vsel %vm60, %v262, 0
    %v279 = vsel %vm60, %v263, 0
    %281 = vmatprep.subr.mxu0 0.0
    %282 = vmatpush1.msra.mxu0 %v255
    %283 = vmatprep.subr.mxu0 0.0
    %284 = vmatpush1.msra.mxu0 %v256
    %285 = vmatprep.subr.mxu0 0.0
    %286 = vmatpush1.msra.mxu0 %v257
    %287 = vmatprep.subr.mxu0 0.0
    %288 = vmatpush1.msra.mxu0 %v258
    %289 = vmatprep.subr.mxu0 0.0
    %290 = vmatpush1.msra.mxu0 0.0
    %291 = vmatprep.subr.mxu0 0.0
    %292 = vmatpush1.msra.mxu0 0.0
    %293 = vmatprep.subr.mxu0 0.0
    %294 = vmatpush1.msra.mxu0 0.0
    %295 = vmatprep.subr.mxu0 0.0
    %296 = vmatpush1.msra.mxu0 0.0
    %297 = vmatprep.subr.mxu0 0.0
    %298 = vmatpush1.msra.mxu0 0.0
    %299 = vmatprep.subr.mxu0 0.0
    %300 = vmatpush1.msra.mxu0 0.0
    %301 = vmatprep.subr.mxu0 0.0
    %302 = vmatpush1.msra.mxu0 0.0
    %303 = vmatprep.subr.mxu0 0.0
    %304 = vmatpush1.msra.mxu0 0.0
    %305 = vmatprep.subr.mxu0 0.0
    %306 = vmatpush1.msra.mxu0 0.0
    %307 = vmatprep.subr.mxu0 0.0
    %308 = vmatpush1.msra.mxu0 0.0
    %309 = vmatprep.subr.mxu0 0.0
    %310 = vmatpush1.msra.mxu0 0.0
    %311 = vmatprep.subr.mxu0 0.0
    %312 = vmatpush1.msra.mxu0 0.0
    %313 = vmatprep.subr.mxu0 0.0
    %314 = vmatpush1.msra.mxu0 0.0
    %315 = vmatprep.subr.mxu0 0.0
    %316 = vmatpush1.msra.mxu0 0.0
    %317 = vmatprep.subr.mxu0 0.0
    %318 = vmatpush1.msra.mxu0 0.0
    %319 = vmatprep.subr.mxu0 0.0
    %320 = vmatpush1.msra.mxu0 0.0
    %321 = vmatprep.subr.mxu0 0.0
    %322 = vmatpush1.msra.mxu0 0.0
    %323 = vmatprep.subr.mxu0 0.0
    %324 = vmatpush1.msra.mxu0 0.0
    %325 = vmatprep.subr.mxu0 0.0
    %326 = vmatpush1.msra.mxu0 0.0
    %327 = vmatprep.subr.mxu0 0.0
    %328 = vmatpush1.msra.mxu0 0.0
    %329 = vmatprep.subr.mxu0 0.0
    %330 = vmatpush1.msra.mxu0 0.0
    %331 = vmatprep.subr.mxu0 0.0
    %332 = vmatpush1.msra.mxu0 0.0
    %333 = vmatprep.subr.mxu0 0.0
    %334 = vmatpush1.msra.mxu0 0.0
    %335 = vmatprep.subr.mxu0 0.0
    %336 = vmatpush1.msra.mxu0 0.0
    %337 = vmatprep.subr.mxu0 0.0
    %338 = vmatpush1.msra.mxu0 0.0
    %339 = vmatprep.subr.mxu0 0.0
    %340 = vmatpush1.msra.mxu0 0.0
    %341 = vmatprep.subr.mxu0 0.0
    %342 = vmatpush1.msra.mxu0 0.0
    %343 = vmatprep.subr.mxu0 0.0
    %344 = vmatpush1.msra.mxu0 0.0
    %345 = vmatprep.mubr.f32.mxu0 0.0
    %346 = vmatmul.mubr.f32.gmra.mrb[0].mxu0 %v270
    %v347 = vpop.f32.mrb[0].mxu0
    %v348 = vadd.f32 %v265, %v347
    %v349 = vpop.f32.mrb[0].mxu0
    %350 = vmatprep.mubr.f32.mxu0 0.0
    %351 = vmatmul.mubr.f32.gmra.mrb[0].mxu0 %v273
    %v352 = vpop.f32.mrb[0].mxu0
    %v353 = vadd.f32 %v266, %v352
    %v354 = vpop.f32.mrb[0].mxu0
    %355 = vmatprep.mubr.f32.mxu0 0.0
    %356 = vmatmul.mubr.f32.gmra.mrb[0].mxu0 %v276
    %v357 = vpop.f32.mrb[0].mxu0
    %v358 = vadd.f32 %v267, %v357
    %v359 = vpop.f32.mrb[0].mxu0
    %360 = vmatprep.mubr.f32.mxu0 0.0
    %361 = vmatmul.mubr.f32.gmra.mrb[0].mxu0 %v279
    %v362 = vpop.f32.mrb[0].mxu0
    %v363 = vadd.f32 %v268, %v362
    %v364 = vpop.f32.mrb[0].mxu0
    %365 = vdwg.mxu0
    %366 = vadd.xlane.f32.xlu0 %v348
    %v367 = vpop.xlane.xlu0 %366
    %368 = vadd.xlane.f32.xlu0 %v353
    %v369 = vpop.xlane.xlu0 %368
    %370 = vadd.xlane.f32.xlu0 %v358
    %v371 = vpop.xlane.xlu0 %370
    %372 = vadd.xlane.f32.xlu0 %v363
    %v373 = vpop.xlane.xlu0 %372
    %v374 = vmul.f32 %v367, %v166
    %v375 = vmul.f32 %v369, %v166
    %v376 = vmul.f32 %v371, %v166
    %v377 = vmul.f32 %v373, %v166
    %v378 = vsub.f32 %v348, %v374
    %v379 = vsub.f32 %v353, %v375
    %v380 = vsub.f32 %v358, %v376
    %v381 = vsub.f32 %v363, %v377
    %v382 = vmul.f32 %v378, %v378
    %v383 = vmul.f32 %v379, %v379
    %v384 = vmul.f32 %v380, %v380
    %v385 = vmul.f32 %v381, %v381
    %386 = vadd.xlane.f32.xlu0 %v382
    %v387 = vpop.xlane.xlu0 %386
    %388 = vadd.xlane.f32.xlu0 %v383
    %v389 = vpop.xlane.xlu0 %388
    %390 = vadd.xlane.f32.xlu0 %v384
    %v391 = vpop.xlane.xlu0 %390
    %392 = vadd.xlane.f32.xlu0 %v385
    %v393 = vpop.xlane.xlu0 %392
    %v394 = vmul.f32 %v387, %v166
    %v395 = vmul.f32 %v389, %v166
    %v396 = vmul.f32 %v391, %v166
    %v397 = vmul.f32 %v393, %v166
    %v398 = vadd.f32 %v394, 1e-05
    %v399 = vadd.f32 %v395, 1e-05
    %v400 = vadd.f32 %v396, 1e-05
    %v401 = vadd.f32 %v397, 1e-05
    %v402 = vrsqrt.pop %v398
    %v403 = vrsqrt.pop %v399
    %v404 = vrsqrt.pop %v400
    %v405 = vrsqrt.pop %v401
    %v406 = vmul.f32 %v378, %v402
    %v407 = vmul.f32 %v379, %v403
    %v408 = vmul.f32 %v380, %v404
    %v409 = vmul.f32 %v381, %v405
    %s410 = scalar_lea.vmem [#allocation2], 256
    %v411 = vld [vmem:[%s410] sm:$0xff]
    %v412 = vld [vmem:[%s410 + $0x8] sm:$0xff]
    %v413 = vld [vmem:[%s410 + $0x10] sm:$0xff]
    %v414 = vld [vmem:[%s410 + $0x18] sm:$0xff]
    %v415 = vmul.f32 %v406, %v411
    %v416 = vmul.f32 %v407, %v412
    %v417 = vmul.f32 %v408, %v413
    %v418 = vmul.f32 %v409, %v414
    %s419 = scalar_lea.vmem [#allocation2], 320
    %v420 = vld [vmem:[%s419] sm:$0xff]
    %v421 = vld [vmem:[%s419 + $0x8] sm:$0xff]
    %v422 = vld [vmem:[%s419 + $0x10] sm:$0xff]
    %v423 = vld [vmem:[%s419 + $0x18] sm:$0xff]
    %v424 = vadd.f32 %v415, %v420
    %v425 = vadd.f32 %v416, %v421
    %v426 = vadd.f32 %v417, %v422
    %v427 = vadd.f32 %v418, %v423
    %s428 = sld [smem:[#allocation6 + $0x1]]
    %v429 = vstv %s428
    %v430 = vmul.f32 %v429, %v424
    %v431 = vmul.f32 %v429, %v425
    %v432 = vmul.f32 %v429, %v426
    %v433 = vmul.f32 %v429, %v427
    %v434 = vxor.u32 %v430, 2147483648
    %v435 = vxor.u32 %v431, 2147483648
    %v436 = vxor.u32 %v432, 2147483648
    %v437 = vxor.u32 %v433, 2147483648
    %v438 = vmul.f32 %v434, 1.442695
    %v439 = vpow.pop %v438
    %v440 = vmul.f32 %v435, 1.442695
    %v441 = vpow.pop %v440
    %v442 = vmul.f32 %v436, 1.442695
    %v443 = vpow.pop %v442
    %v444 = vmul.f32 %v437, 1.442695
    %v445 = vpow.pop %v444
    %v446 = vadd.f32 %v439, 1.0
    %v447 = vadd.f32 %v441, 1.0
    %v448 = vadd.f32 %v443, 1.0
    %v449 = vadd.f32 %v445, 1.0
    %v450 = vrcp.pop %v446
    %v451 = vmul.f32 1.0, %v450
    %v452 = vrcp.pop %v447
    %v453 = vmul.f32 1.0, %v452
    %v454 = vrcp.pop %v448
    %v455 = vmul.f32 1.0, %v454
    %v456 = vrcp.pop %v449
    %v457 = vmul.f32 1.0, %v456
    %v458 = vmul.f32 %v424, %v451
    %v459 = vmul.f32 %v425, %v453
    %v460 = vmul.f32 %v426, %v455
    %v461 = vmul.f32 %v427, %v457
    %v462 = vadd.f32 %v458, %v255
    %v463 = vadd.f32 %v459, %v256
    %v464 = vadd.f32 %v460, %v257
    %v465 = vadd.f32 %v461, %v258
    %s466 = scalar_lea.vmem %s2, 128
    %v467 = vld [vmem:[%s466] sm:$0xff]
    %v468 = vld [vmem:[%s466 + $0x8] sm:$0xff]
    %v469 = vld [vmem:[%s466 + $0x10] sm:$0xff]
    %v470 = vld [vmem:[%s466 + $0x18] sm:$0xff]
    %s471 = scalar_lea.vmem [#allocation2], 384
    %v472 = vld [vmem:[%s471] sm:$0xff]
    %v473 = vld [vmem:[%s471 + $0x8] sm:$0xff]
    %v474 = vld [vmem:[%s471 + $0x10] sm:$0xff]
    %v475 = vld [vmem:[%s471 + $0x18] sm:$0xff]
    %v477 = vsel %vm60, %v467, 0
    %v480 = vsel %vm60, %v468, 0
    %v483 = vsel %vm60, %v469, 0
    %v486 = vsel %vm60, %v470, 0
    %488 = vmatprep.subr.mxu0 0.0
    %489 = vmatpush1.msra.mxu0 %v462
    %490 = vmatprep.subr.mxu0 0.0
    %491 = vmatpush1.msra.mxu0 %v463
    %492 = vmatprep.subr.mxu0 0.0
    %493 = vmatpush1.msra.mxu0 %v464
    %494 = vmatprep.subr.mxu0 0.0
    %495 = vmatpush1.msra.mxu0 %v465
    %496 = vmatprep.subr.mxu0 0.0
    %497 = vmatpush1.msra.mxu0 0.0
    %498 = vmatprep.subr.mxu0 0.0
    %499 = vmatpush1.msra.mxu0 0.0
    %500 = vmatprep.subr.mxu0 0.0
    %501 = vmatpush1.msra.mxu0 0.0
    %502 = vmatprep.subr.mxu0 0.0
    %503 = vmatpush1.msra.mxu0 0.0
    %504 = vmatprep.subr.mxu0 0.0
    %505 = vmatpush1.msra.mxu0 0.0
    %506 = vmatprep.subr.mxu0 0.0
    %507 = vmatpush1.msra.mxu0 0.0
    %508 = vmatprep.subr.mxu0 0.0
    %509 = vmatpush1.msra.mxu0 0.0
    %510 = vmatprep.subr.mxu0 0.0
    %511 = vmatpush1.msra.mxu0 0.0
    %512 = vmatprep.subr.mxu0 0.0
    %513 = vmatpush1.msra.mxu0 0.0
    %514 = vmatprep.subr.mxu0 0.0
    %515 = vmatpush1.msra.mxu0 0.0
    %516 = vmatprep.subr.mxu0 0.0
    %517 = vmatpush1.msra.mxu0 0.0
    %518 = vmatprep.subr.mxu0 0.0
    %519 = vmatpush1.msra.mxu0 0.0
    %520 = vmatprep.subr.mxu0 0.0
    %521 = vmatpush1.msra.mxu0 0.0
    %522 = vmatprep.subr.mxu0 0.0
    %523 = vmatpush1.msra.mxu0 0.0
    %524 = vmatprep.subr.mxu0 0.0
    %525 = vmatpush1.msra.mxu0 0.0
    %526 = vmatprep.subr.mxu0 0.0
    %527 = vmatpush1.msra.mxu0 0.0
    %528 = vmatprep.subr.mxu0 0.0
    %529 = vmatpush1.msra.mxu0 0.0
    %530 = vmatprep.subr.mxu0 0.0
    %531 = vmatpush1.msra.mxu0 0.0
    %532 = vmatprep.subr.mxu0 0.0
    %533 = vmatpush1.msra.mxu0 0.0
    %534 = vmatprep.subr.mxu0 0.0
    %535 = vmatpush1.msra.mxu0 0.0
    %536 = vmatprep.subr.mxu0 0.0
    %537 = vmatpush1.msra.mxu0 0.0
    %538 = vmatprep.subr.mxu0 0.0
    %539 = vmatpush1.msra.mxu0 0.0
    %540 = vmatprep.subr.mxu0 0.0
    %541 = vmatpush1.msra.mxu0 0.0
    %542 = vmatprep.subr.mxu0 0.0
    %543 = vmatpush1.msra.mxu0 0.0
    %544 = vmatprep.subr.mxu0 0.0
    %545 = vmatpush1.msra.mxu0 0.0
    %546 = vmatprep.subr.mxu0 0.0
    %547 = vmatpush1.msra.mxu0 0.0
    %548 = vmatprep.subr.mxu0 0.0
    %549 = vmatpush1.msra.mxu0 0.0
    %550 = vmatprep.subr.mxu0 0.0
    %551 = vmatpush1.msra.mxu0 0.0
    %552 = vmatprep.mubr.f32.mxu0 0.0
    %553 = vmatmul.mubr.f32.gmra.mrb[0].mxu0 %v477
    %v554 = vpop.f32.mrb[0].mxu0
    %v555 = vadd.f32 %v472, %v554
    %v556 = vpop.f32.mrb[0].mxu0
    %557 = vmatprep.mubr.f32.mxu0 0.0
    %558 = vmatmul.mubr.f32.gmra.mrb[0].mxu0 %v480
    %v559 = vpop.f32.mrb[0].mxu0
    %v560 = vadd.f32 %v473, %v559
    %v561 = vpop.f32.mrb[0].mxu0
    %562 = vmatprep.mubr.f32.mxu0 0.0
    %563 = vmatmul.mubr.f32.gmra.mrb[0].mxu0 %v483
    %v564 = vpop.f32.mrb[0].mxu0
    %v565 = vadd.f32 %v474, %v564
    %v566 = vpop.f32.mrb[0].mxu0
    %567 = vmatprep.mubr.f32.mxu0 0.0
    %568 = vmatmul.mubr.f32.gmra.mrb[0].mxu0 %v486
    %v569 = vpop.f32.mrb[0].mxu0
    %v570 = vadd.f32 %v475, %v569
    %v571 = vpop.f32.mrb[0].mxu0
    %572 = vdwg.mxu0
    %573 = vadd.xlane.f32.xlu0 %v555
    %v574 = vpop.xlane.xlu0 %573
    %575 = vadd.xlane.f32.xlu0 %v560
    %v576 = vpop.xlane.xlu0 %575
    %577 = vadd.xlane.f32.xlu0 %v565
    %v578 = vpop.xlane.xlu0 %577
    %579 = vadd.xlane.f32.xlu0 %v570
    %v580 = vpop.xlane.xlu0 %579
    %v581 = vmul.f32 %v574, %v166
    %v582 = vmul.f32 %v576, %v166
    %v583 = vmul.f32 %v578, %v166
    %v584 = vmul.f32 %v580, %v166
    %v585 = vsub.f32 %v555, %v581
    %v586 = vsub.f32 %v560, %v582
    %v587 = vsub.f32 %v565, %v583
    %v588 = vsub.f32 %v570, %v584
    %v589 = vmul.f32 %v585, %v585
    %v590 = vmul.f32 %v586, %v586
    %v591 = vmul.f32 %v587, %v587
    %v592 = vmul.f32 %v588, %v588
    %593 = vadd.xlane.f32.xlu0 %v589
    %v594 = vpop.xlane.xlu0 %593
    %595 = vadd.xlane.f32.xlu0 %v590
    %v596 = vpop.xlane.xlu0 %595
    %597 = vadd.xlane.f32.xlu0 %v591
    %v598 = vpop.xlane.xlu0 %597
    %599 = vadd.xlane.f32.xlu0 %v592
    %v600 = vpop.xlane.xlu0 %599
    %v601 = vmul.f32 %v594, %v166
    %v602 = vmul.f32 %v596, %v166
    %v603 = vmul.f32 %v598, %v166
    %v604 = vmul.f32 %v600, %v166
    %v605 = vadd.f32 %v601, 1e-05
    %v606 = vadd.f32 %v602, 1e-05
    %v607 = vadd.f32 %v603, 1e-05
    %v608 = vadd.f32 %v604, 1e-05
    %v609 = vrsqrt.pop %v605
    %v610 = vrsqrt.pop %v606
    %v611 = vrsqrt.pop %v607
    %v612 = vrsqrt.pop %v608
    %v613 = vmul.f32 %v585, %v609
    %v614 = vmul.f32 %v586, %v610
    %v615 = vmul.f32 %v587, %v611
    %v616 = vmul.f32 %v588, %v612
    %s617 = scalar_lea.vmem [#allocation2], 448
    %v618 = vld [vmem:[%s617] sm:$0xff]
    %v619 = vld [vmem:[%s617 + $0x8] sm:$0xff]
    %v620 = vld [vmem:[%s617 + $0x10] sm:$0xff]
    %v621 = vld [vmem:[%s617 + $0x18] sm:$0xff]
    %v622 = vmul.f32 %v613, %v618
    %v623 = vmul.f32 %v614, %v619
    %v624 = vmul.f32 %v615, %v620
    %v625 = vmul.f32 %v616, %v621
    %s626 = scalar_lea.vmem [#allocation2], 512
    %v627 = vld [vmem:[%s626] sm:$0xff]
    %v628 = vld [vmem:[%s626 + $0x8] sm:$0xff]
    %v629 = vld [vmem:[%s626 + $0x10] sm:$0xff]
    %v630 = vld [vmem:[%s626 + $0x18] sm:$0xff]
    %v631 = vadd.f32 %v622, %v627
    %v632 = vadd.f32 %v623, %v628
    %v633 = vadd.f32 %v624, %v629
    %v634 = vadd.f32 %v625, %v630
    %s635 = sld [smem:[#allocation6 + $0x2]]
    %v636 = vstv %s635
    %v637 = vmul.f32 %v636, %v631
    %v638 = vmul.f32 %v636, %v632
    %v639 = vmul.f32 %v636, %v633
    %v640 = vmul.f32 %v636, %v634
    %v641 = vxor.u32 %v637, 2147483648
    %v642 = vxor.u32 %v638, 2147483648
    %v643 = vxor.u32 %v639, 2147483648
    %v644 = vxor.u32 %v640, 2147483648
    %v645 = vmul.f32 %v641, 1.442695
    %v646 = vpow.pop %v645
    %v647 = vmul.f32 %v642, 1.442695
    %v648 = vpow.pop %v647
    %v649 = vmul.f32 %v643, 1.442695
    %v650 = vpow.pop %v649
    %v651 = vmul.f32 %v644, 1.442695
    %v652 = vpow.pop %v651
    %v653 = vadd.f32 %v646, 1.0
    %v654 = vadd.f32 %v648, 1.0
    %v655 = vadd.f32 %v650, 1.0
    %v656 = vadd.f32 %v652, 1.0
    %v657 = vrcp.pop %v653
    %v658 = vmul.f32 1.0, %v657
    %v659 = vrcp.pop %v654
    %v660 = vmul.f32 1.0, %v659
    %v661 = vrcp.pop %v655
    %v662 = vmul.f32 1.0, %v661
    %v663 = vrcp.pop %v656
    %v664 = vmul.f32 1.0, %v663
    %v665 = vmul.f32 %v631, %v658
    %v666 = vmul.f32 %v632, %v660
    %v667 = vmul.f32 %v633, %v662
    %v668 = vmul.f32 %v634, %v664
    %v669 = vadd.f32 %v665, %v462
    %v670 = vadd.f32 %v666, %v463
    %v671 = vadd.f32 %v667, %v464
    %v672 = vadd.f32 %v668, %v465
    %s673 = scalar_lea.vmem %s2, 192
    %v674 = vld [vmem:[%s673] sm:$0xff]
    %v675 = vld [vmem:[%s673 + $0x8] sm:$0xff]
    %v676 = vld [vmem:[%s673 + $0x10] sm:$0xff]
    %v677 = vld [vmem:[%s673 + $0x18] sm:$0xff]
    %s678 = scalar_lea.vmem [#allocation2], 576
    %v679 = vld [vmem:[%s678] sm:$0xff]
    %v680 = vld [vmem:[%s678 + $0x8] sm:$0xff]
    %v681 = vld [vmem:[%s678 + $0x10] sm:$0xff]
    %v682 = vld [vmem:[%s678 + $0x18] sm:$0xff]
    %v684 = vsel %vm60, %v674, 0
    %v687 = vsel %vm60, %v675, 0
    %v690 = vsel %vm60, %v676, 0
    %v693 = vsel %vm60, %v677, 0
    %695 = vmatprep.subr.mxu0 0.0
    %696 = vmatpush1.msra.mxu0 %v669
    %697 = vmatprep.subr.mxu0 0.0
    %698 = vmatpush1.msra.mxu0 %v670
    %699 = vmatprep.subr.mxu0 0.0
    %700 = vmatpush1.msra.mxu0 %v671
    %701 = vmatprep.subr.mxu0 0.0
    %702 = vmatpush1.msra.mxu0 %v672
    %703 = vmatprep.subr.mxu0 0.0
    %704 = vmatpush1.msra.mxu0 0.0
    %705 = vmatprep.subr.mxu0 0.0
    %706 = vmatpush1.msra.mxu0 0.0
    %707 = vmatprep.subr.mxu0 0.0
    %708 = vmatpush1.msra.mxu0 0.0
    %709 = vmatprep.subr.mxu0 0.0
    %710 = vmatpush1.msra.mxu0 0.0
    %711 = vmatprep.subr.mxu0 0.0
    %712 = vmatpush1.msra.mxu0 0.0
    %713 = vmatprep.subr.mxu0 0.0
    %714 = vmatpush1.msra.mxu0 0.0
    %715 = vmatprep.subr.mxu0 0.0
    %716 = vmatpush1.msra.mxu0 0.0
    %717 = vmatprep.subr.mxu0 0.0
    %718 = vmatpush1.msra.mxu0 0.0
    %719 = vmatprep.subr.mxu0 0.0
    %720 = vmatpush1.msra.mxu0 0.0
    %721 = vmatprep.subr.mxu0 0.0
    %722 = vmatpush1.msra.mxu0 0.0
    %723 = vmatprep.subr.mxu0 0.0
    %724 = vmatpush1.msra.mxu0 0.0
    %725 = vmatprep.subr.mxu0 0.0
    %726 = vmatpush1.msra.mxu0 0.0
    %727 = vmatprep.subr.mxu0 0.0
    %728 = vmatpush1.msra.mxu0 0.0
    %729 = vmatprep.subr.mxu0 0.0
    %730 = vmatpush1.msra.mxu0 0.0
    %731 = vmatprep.subr.mxu0 0.0
    %732 = vmatpush1.msra.mxu0 0.0
    %733 = vmatprep.subr.mxu0 0.0
    %734 = vmatpush1.msra.mxu0 0.0
    %735 = vmatprep.subr.mxu0 0.0
    %736 = vmatpush1.msra.mxu0 0.0
    %737 = vmatprep.subr.mxu0 0.0
    %738 = vmatpush1.msra.mxu0 0.0
    %739 = vmatprep.subr.mxu0 0.0
    %740 = vmatpush1.msra.mxu0 0.0
    %741 = vmatprep.subr.mxu0 0.0
    %742 = vmatpush1.msra.mxu0 0.0
    %743 = vmatprep.subr.mxu0 0.0
    %744 = vmatpush1.msra.mxu0 0.0
    %745 = vmatprep.subr.mxu0 0.0
    %746 = vmatpush1.msra.mxu0 0.0
    %747 = vmatprep.subr.mxu0 0.0
    %748 = vmatpush1.msra.mxu0 0.0
    %749 = vmatprep.subr.mxu0 0.0
    %750 = vmatpush1.msra.mxu0 0.0
    %751 = vmatprep.subr.mxu0 0.0
    %752 = vmatpush1.msra.mxu0 0.0
    %753 = vmatprep.subr.mxu0 0.0
    %754 = vmatpush1.msra.mxu0 0.0
    %755 = vmatprep.subr.mxu0 0.0
    %756 = vmatpush1.msra.mxu0 0.0
    %757 = vmatprep.subr.mxu0 0.0
    %758 = vmatpush1.msra.mxu0 0.0
    %759 = vmatprep.mubr.f32.mxu0 0.0
    %760 = vmatmul.mubr.f32.gmra.mrb[0].mxu0 %v684
    %v761 = vpop.f32.mrb[0].mxu0
    %v762 = vadd.f32 %v679, %v761
    %v763 = vpop.f32.mrb[0].mxu0
    %764 = vmatprep.mubr.f32.mxu0 0.0
    %765 = vmatmul.mubr.f32.gmra.mrb[0].mxu0 %v687
    %v766 = vpop.f32.mrb[0].mxu0
    %v767 = vadd.f32 %v680, %v766
    %v768 = vpop.f32.mrb[0].mxu0
    %769 = vmatprep.mubr.f32.mxu0 0.0
    %770 = vmatmul.mubr.f32.gmra.mrb[0].mxu0 %v690
    %v771 = vpop.f32.mrb[0].mxu0
    %v772 = vadd.f32 %v681, %v771
    %v773 = vpop.f32.mrb[0].mxu0
    %774 = vmatprep.mubr.f32.mxu0 0.0
    %775 = vmatmul.mubr.f32.gmra.mrb[0].mxu0 %v693
    %v776 = vpop.f32.mrb[0].mxu0
    %v777 = vadd.f32 %v682, %v776
    %v778 = vpop.f32.mrb[0].mxu0
    %779 = vdwg.mxu0
    %v780 = vld [vmem:[%s1] sm:$0xff]
    %v781 = vld [vmem:[%s1 + $0x8] sm:$0xff]
    %v782 = vmul.f32 %v772, 0.5
    %v783 = vmul.f32 %v777, 0.5
    %v784 = vmul.f32 %v782, 1.442695
    %v785 = vpow.pop %v784
    %v786 = vmul.f32 %v783, 1.442695
    %v787 = vpow.pop %v786
    %v788 = vmul.f32 %v780, %v785
    %v789 = vmul.f32 %v781, %v787
    %v790 = vadd.f32 %v762, %v788
    %v791 = vadd.f32 %v767, %v789
    %s792 = scalar_lea.vmem %s2, 256
    %v793 = vld [vmem:[%s792] sm:$0xff]
    %v794 = vld [vmem:[%s792 + $0x8] sm:$0xff]
    %v795 = vld [vmem:[%s792 + $0x10] sm:$0xff]
    %v796 = vld [vmem:[%s792 + $0x18] sm:$0xff]
    %v797 = vld [vmem:[%s792 + $0x20] sm:$0xff]
    %v798 = vld [vmem:[%s792 + $0x28] sm:$0xff]
    %v799 = vld [vmem:[%s792 + $0x30] sm:$0xff]
    %v800 = vld [vmem:[%s792 + $0x38] sm:$0xff]
    %s801 = scalar_lea.vmem [#allocation2], 640
    %v802 = vld [vmem:[%s801] sm:$0xff]
    %v803 = vld [vmem:[%s801 + $0x8] sm:$0xff]
    %v804 = vld [vmem:[%s801 + $0x10] sm:$0xff]
    %v805 = vld [vmem:[%s801 + $0x18] sm:$0xff]
    %v806 = vld [vmem:[%s801 + $0x20] sm:$0xff]
    %v807 = vld [vmem:[%s801 + $0x28] sm:$0xff]
    %v808 = vld [vmem:[%s801 + $0x30] sm:$0xff]
    %v809 = vld [vmem:[%s801 + $0x38] sm:$0xff]
    %v811 = vsel %vm60, %v793, 0
    %v814 = vsel %vm60, %v794, 0
    %v817 = vsel %vm60, %v795, 0
    %v820 = vsel %vm60, %v796, 0
    %v823 = vsel %vm60, %v797, 0
    %v826 = vsel %vm60, %v798, 0
    %v829 = vsel %vm60, %v799, 0
    %v832 = vsel %vm60, %v800, 0
    %834 = vmatprep.subr.mxu0 0.0
    %835 = vmatpush1.msra.mxu0 %v790
    %836 = vmatprep.subr.mxu0 0.0
    %837 = vmatpush1.msra.mxu0 %v791
    %838 = vmatprep.subr.mxu0 0.0
    %839 = vmatpush1.msra.mxu0 0.0
    %840 = vmatprep.subr.mxu0 0.0
    %841 = vmatpush1.msra.mxu0 0.0
    %842 = vmatprep.subr.mxu0 0.0
    %843 = vmatpush1.msra.mxu0 0.0
    %844 = vmatprep.subr.mxu0 0.0
    %845 = vmatpush1.msra.mxu0 0.0
    %846 = vmatprep.subr.mxu0 0.0
    %847 = vmatpush1.msra.mxu0 0.0
    %848 = vmatprep.subr.mxu0 0.0
    %849 = vmatpush1.msra.mxu0 0.0
    %850 = vmatprep.subr.mxu0 0.0
    %851 = vmatpush1.msra.mxu0 0.0
    %852 = vmatprep.subr.mxu0 0.0
    %853 = vmatpush1.msra.mxu0 0.0
    %854 = vmatprep.subr.mxu0 0.0
    %855 = vmatpush1.msra.mxu0 0.0
    %856 = vmatprep.subr.mxu0 0.0
    %857 = vmatpush1.msra.mxu0 0.0
    %858 = vmatprep.subr.mxu0 0.0
    %859 = vmatpush1.msra.mxu0 0.0
    %860 = vmatprep.subr.mxu0 0.0
    %861 = vmatpush1.msra.mxu0 0.0
    %862 = vmatprep.subr.mxu0 0.0
    %863 = vmatpush1.msra.mxu0 0.0
    %864 = vmatprep.subr.mxu0 0.0
    %865 = vmatpush1.msra.mxu0 0.0
    %866 = vmatprep.subr.mxu0 0.0
    %867 = vmatpush1.msra.mxu0 0.0
    %868 = vmatprep.subr.mxu0 0.0
    %869 = vmatpush1.msra.mxu0 0.0
    %870 = vmatprep.subr.mxu0 0.0
    %871 = vmatpush1.msra.mxu0 0.0
    %872 = vmatprep.subr.mxu0 0.0
    %873 = vmatpush1.msra.mxu0 0.0
    %874 = vmatprep.subr.mxu0 0.0
    %875 = vmatpush1.msra.mxu0 0.0
    %876 = vmatprep.subr.mxu0 0.0
    %877 = vmatpush1.msra.mxu0 0.0
    %878 = vmatprep.subr.mxu0 0.0
    %879 = vmatpush1.msra.mxu0 0.0
    %880 = vmatprep.subr.mxu0 0.0
    %881 = vmatpush1.msra.mxu0 0.0
    %882 = vmatprep.subr.mxu0 0.0
    %883 = vmatpush1.msra.mxu0 0.0
    %884 = vmatprep.subr.mxu0 0.0
    %885 = vmatpush1.msra.mxu0 0.0
    %886 = vmatprep.subr.mxu0 0.0
    %887 = vmatpush1.msra.mxu0 0.0
    %888 = vmatprep.subr.mxu0 0.0
    %889 = vmatpush1.msra.mxu0 0.0
    %890 = vmatprep.subr.mxu0 0.0
    %891 = vmatpush1.msra.mxu0 0.0
    %892 = vmatprep.subr.mxu0 0.0
    %893 = vmatpush1.msra.mxu0 0.0
    %894 = vmatprep.subr.mxu0 0.0
    %895 = vmatpush1.msra.mxu0 0.0
    %896 = vmatprep.subr.mxu0 0.0
    %897 = vmatpush1.msra.mxu0 0.0
    %898 = vmatprep.mubr.f32.mxu0 0.0
    %899 = vmatmul.mubr.f32.gmra.mrb[0].mxu0 %v811
    %v900 = vpop.f32.mrb[0].mxu0
    %v901 = vadd.f32 %v802, %v900
    %v902 = vpop.f32.mrb[0].mxu0
    %903 = vmatprep.mubr.f32.mxu0 0.0
    %904 = vmatmul.mubr.f32.gmra.mrb[0].mxu0 %v814
    %v905 = vpop.f32.mrb[0].mxu0
    %v906 = vadd.f32 %v803, %v905
    %v907 = vpop.f32.mrb[0].mxu0
    %908 = vmatprep.mubr.f32.mxu0 0.0
    %909 = vmatmul.mubr.f32.gmra.mrb[0].mxu0 %v817
    %v910 = vpop.f32.mrb[0].mxu0
    %v911 = vadd.f32 %v804, %v910
    %v912 = vpop.f32.mrb[0].mxu0
    %913 = vmatprep.mubr.f32.mxu0 0.0
    %914 = vmatmul.mubr.f32.gmra.mrb[0].mxu0 %v820
    %v915 = vpop.f32.mrb[0].mxu0
    %v916 = vadd.f32 %v805, %v915
    %v917 = vpop.f32.mrb[0].mxu0
    %918 = vmatprep.mubr.f32.mxu0 0.0
    %919 = vmatmul.mubr.f32.gmra.mrb[0].mxu0 %v823
    %v920 = vpop.f32.mrb[0].mxu0
    %v921 = vadd.f32 %v806, %v920
    %v922 = vpop.f32.mrb[0].mxu0
    %923 = vmatprep.mubr.f32.mxu0 0.0
    %924 = vmatmul.mubr.f32.gmra.mrb[0].mxu0 %v826
    %v925 = vpop.f32.mrb[0].mxu0
    %v926 = vadd.f32 %v807, %v925
    %v927 = vpop.f32.mrb[0].mxu0
    %928 = vmatprep.mubr.f32.mxu0 0.0
    %929 = vmatmul.mubr.f32.gmra.mrb[0].mxu0 %v829
    %v930 = vpop.f32.mrb[0].mxu0
    %v931 = vadd.f32 %v808, %v930
    %v932 = vpop.f32.mrb[0].mxu0
    %933 = vmatprep.mubr.f32.mxu0 0.0
    %934 = vmatmul.mubr.f32.gmra.mrb[0].mxu0 %v832
    %v935 = vpop.f32.mrb[0].mxu0
    %v936 = vadd.f32 %v809, %v935
    %v937 = vpop.f32.mrb[0].mxu0
    %938 = vdwg.mxu0
    %939 = vadd.xlane.f32.xlu0 %v901
    %v940 = vpop.xlane.xlu0 %939
    %941 = vadd.xlane.f32.xlu0 %v906
    %v942 = vpop.xlane.xlu0 %941
    %943 = vadd.xlane.f32.xlu0 %v911
    %v944 = vpop.xlane.xlu0 %943
    %945 = vadd.xlane.f32.xlu0 %v916
    %v946 = vpop.xlane.xlu0 %945
    %v947 = vmul.f32 %v940, %v166
    %v948 = vmul.f32 %v942, %v166
    %v949 = vmul.f32 %v944, %v166
    %v950 = vmul.f32 %v946, %v166
    %v951 = vsub.f32 %v901, %v947
    %v952 = vsub.f32 %v906, %v948
    %v953 = vsub.f32 %v911, %v949
    %v954 = vsub.f32 %v916, %v950
    %v955 = vmul.f32 %v951, %v951
    %v956 = vmul.f32 %v952, %v952
    %v957 = vmul.f32 %v953, %v953
    %v958 = vmul.f32 %v954, %v954
    %959 = vadd.xlane.f32.xlu0 %v955
    %v960 = vpop.xlane.xlu0 %959
    %961 = vadd.xlane.f32.xlu0 %v956
    %v962 = vpop.xlane.xlu0 %961
    %963 = vadd.xlane.f32.xlu0 %v957
    %v964 = vpop.xlane.xlu0 %963
    %965 = vadd.xlane.f32.xlu0 %v958
    %v966 = vpop.xlane.xlu0 %965
    %v967 = vmul.f32 %v960, %v166
    %v968 = vmul.f32 %v962, %v166
    %v969 = vmul.f32 %v964, %v166
    %v970 = vmul.f32 %v966, %v166
    %v971 = vadd.f32 %v967, 1e-05
    %v972 = vadd.f32 %v968, 1e-05
    %v973 = vadd.f32 %v969, 1e-05
    %v974 = vadd.f32 %v970, 1e-05
    %v975 = vrsqrt.pop %v971
    %v976 = vrsqrt.pop %v972
    %v977 = vrsqrt.pop %v973
    %v978 = vrsqrt.pop %v974
    %v979 = vmul.f32 %v951, %v975
    %v980 = vmul.f32 %v952, %v976
    %v981 = vmul.f32 %v953, %v977
    %v982 = vmul.f32 %v954, %v978
    %s983 = scalar_lea.vmem [#allocation2], 704
    %v984 = vld [vmem:[%s983] sm:$0xff]
    %v985 = vld [vmem:[%s983 + $0x8] sm:$0xff]
    %v986 = vld [vmem:[%s983 + $0x10] sm:$0xff]
    %v987 = vld [vmem:[%s983 + $0x18] sm:$0xff]
    %v988 = vmul.f32 %v979, %v984
    %v989 = vmul.f32 %v980, %v985
    %v990 = vmul.f32 %v981, %v986
    %v991 = vmul.f32 %v982, %v987
    %s992 = scalar_lea.vmem [#allocation2], 768
    %v993 = vld [vmem:[%s992] sm:$0xff]
    %v994 = vld [vmem:[%s992 + $0x8] sm:$0xff]
    %v995 = vld [vmem:[%s992 + $0x10] sm:$0xff]
    %v996 = vld [vmem:[%s992 + $0x18] sm:$0xff]
    %v997 = vadd.f32 %v988, %v993
    %v998 = vadd.f32 %v989, %v994
    %v999 = vadd.f32 %v990, %v995
    %v1000 = vadd.f32 %v991, %v996
    %s1001 = sld [smem:[#allocation6 + $0x3]]
    %v1002 = vstv %s1001
    %v1003 = vmul.f32 %v1002, %v997
    %v1004 = vmul.f32 %v1002, %v998
    %v1005 = vmul.f32 %v1002, %v999
    %v1006 = vmul.f32 %v1002, %v1000
    %v1007 = vxor.u32 %v1003, 2147483648
    %v1008 = vxor.u32 %v1004, 2147483648
    %v1009 = vxor.u32 %v1005, 2147483648
    %v1010 = vxor.u32 %v1006, 2147483648
    %v1011 = vmul.f32 %v1007, 1.442695
    %v1012 = vpow.pop %v1011
    %v1013 = vmul.f32 %v1008, 1.442695
    %v1014 = vpow.pop %v1013
    %v1015 = vmul.f32 %v1009, 1.442695
    %v1016 = vpow.pop %v1015
    %v1017 = vmul.f32 %v1010, 1.442695
    %v1018 = vpow.pop %v1017
    %v1019 = vadd.f32 %v1012, 1.0
    %v1020 = vadd.f32 %v1014, 1.0
    %v1021 = vadd.f32 %v1016, 1.0
    %v1022 = vadd.f32 %v1018, 1.0
    %v1023 = vrcp.pop %v1019
    %v1024 = vmul.f32 1.0, %v1023
    %v1025 = vrcp.pop %v1020
    %v1026 = vmul.f32 1.0, %v1025
    %v1027 = vrcp.pop %v1021
    %v1028 = vmul.f32 1.0, %v1027
    %v1029 = vrcp.pop %v1022
    %v1030 = vmul.f32 1.0, %v1029
    %v1031 = vmul.f32 %v997, %v1024
    %v1032 = vmul.f32 %v998, %v1026
    %v1033 = vmul.f32 %v999, %v1028
    %v1034 = vmul.f32 %v1000, %v1030
    %v1035 = vadd.f32 %v1031, %v921
    %v1036 = vadd.f32 %v1032, %v926
    %v1037 = vadd.f32 %v1033, %v931
    %v1038 = vadd.f32 %v1034, %v936
    %s1039 = scalar_lea.vmem %s2, 320
    %v1040 = vld [vmem:[%s1039] sm:$0xff]
    %v1041 = vld [vmem:[%s1039 + $0x8] sm:$0xff]
    %v1042 = vld [vmem:[%s1039 + $0x10] sm:$0xff]
    %v1043 = vld [vmem:[%s1039 + $0x18] sm:$0xff]
    %s1044 = scalar_lea.vmem [#allocation2], 832
    %v1045 = vld [vmem:[%s1044] sm:$0xff]
    %v1046 = vld [vmem:[%s1044 + $0x8] sm:$0xff]
    %v1047 = vld [vmem:[%s1044 + $0x10] sm:$0xff]
    %v1048 = vld [vmem:[%s1044 + $0x18] sm:$0xff]
    %v1050 = vsel %vm60, %v1040, 0
    %v1053 = vsel %vm60, %v1041, 0
    %v1056 = vsel %vm60, %v1042, 0
    %v1059 = vsel %vm60, %v1043, 0
    %1061 = vmatprep.subr.mxu0 0.0
    %1062 = vmatpush1.msra.mxu0 %v1035
    %1063 = vmatprep.subr.mxu0 0.0
    %1064 = vmatpush1.msra.mxu0 %v1036
    %1065 = vmatprep.subr.mxu0 0.0
    %1066 = vmatpush1.msra.mxu0 %v1037
    %1067 = vmatprep.subr.mxu0 0.0
    %1068 = vmatpush1.msra.mxu0 %v1038
    %1069 = vmatprep.subr.mxu0 0.0
    %1070 = vmatpush1.msra.mxu0 0.0
    %1071 = vmatprep.subr.mxu0 0.0
    %1072 = vmatpush1.msra.mxu0 0.0
    %1073 = vmatprep.subr.mxu0 0.0
    %1074 = vmatpush1.msra.mxu0 0.0
    %1075 = vmatprep.subr.mxu0 0.0
    %1076 = vmatpush1.msra.mxu0 0.0
    %1077 = vmatprep.subr.mxu0 0.0
    %1078 = vmatpush1.msra.mxu0 0.0
    %1079 = vmatprep.subr.mxu0 0.0
    %1080 = vmatpush1.msra.mxu0 0.0
    %1081 = vmatprep.subr.mxu0 0.0
    %1082 = vmatpush1.msra.mxu0 0.0
    %1083 = vmatprep.subr.mxu0 0.0
    %1084 = vmatpush1.msra.mxu0 0.0
    %1085 = vmatprep.subr.mxu0 0.0
    %1086 = vmatpush1.msra.mxu0 0.0
    %1087 = vmatprep.subr.mxu0 0.0
    %1088 = vmatpush1.msra.mxu0 0.0
    %1089 = vmatprep.subr.mxu0 0.0
    %1090 = vmatpush1.msra.mxu0 0.0
    %1091 = vmatprep.subr.mxu0 0.0
    %1092 = vmatpush1.msra.mxu0 0.0
    %1093 = vmatprep.subr.mxu0 0.0
    %1094 = vmatpush1.msra.mxu0 0.0
    %1095 = vmatprep.subr.mxu0 0.0
    %1096 = vmatpush1.msra.mxu0 0.0
    %1097 = vmatprep.subr.mxu0 0.0
    %1098 = vmatpush1.msra.mxu0 0.0
    %1099 = vmatprep.subr.mxu0 0.0
    %1100 = vmatpush1.msra.mxu0 0.0
    %1101 = vmatprep.subr.mxu0 0.0
    %1102 = vmatpush1.msra.mxu0 0.0
    %1103 = vmatprep.subr.mxu0 0.0
    %1104 = vmatpush1.msra.mxu0 0.0
    %1105 = vmatprep.subr.mxu0 0.0
    %1106 = vmatpush1.msra.mxu0 0.0
    %1107 = vmatprep.subr.mxu0 0.0
    %1108 = vmatpush1.msra.mxu0 0.0
    %1109 = vmatprep.subr.mxu0 0.0
    %1110 = vmatpush1.msra.mxu0 0.0
    %1111 = vmatprep.subr.mxu0 0.0
    %1112 = vmatpush1.msra.mxu0 0.0
    %1113 = vmatprep.subr.mxu0 0.0
    %1114 = vmatpush1.msra.mxu0 0.0
    %1115 = vmatprep.subr.mxu0 0.0
    %1116 = vmatpush1.msra.mxu0 0.0
    %1117 = vmatprep.subr.mxu0 0.0
    %1118 = vmatpush1.msra.mxu0 0.0
    %1119 = vmatprep.subr.mxu0 0.0
    %1120 = vmatpush1.msra.mxu0 0.0
    %1121 = vmatprep.subr.mxu0 0.0
    %1122 = vmatpush1.msra.mxu0 0.0
    %1123 = vmatprep.subr.mxu0 0.0
    %1124 = vmatpush1.msra.mxu0 0.0
    %1125 = vmatprep.mubr.f32.mxu0 0.0
    %1126 = vmatmul.mubr.f32.gmra.mrb[0].mxu0 %v1050
    %v1127 = vpop.f32.mrb[0].mxu0
    %v1128 = vadd.f32 %v1045, %v1127
    %v1129 = vpop.f32.mrb[0].mxu0
    %1130 = vmatprep.mubr.f32.mxu0 0.0
    %1131 = vmatmul.mubr.f32.gmra.mrb[0].mxu0 %v1053
    %v1132 = vpop.f32.mrb[0].mxu0
    %v1133 = vadd.f32 %v1046, %v1132
    %v1134 = vpop.f32.mrb[0].mxu0
    %1135 = vmatprep.mubr.f32.mxu0 0.0
    %1136 = vmatmul.mubr.f32.gmra.mrb[0].mxu0 %v1056
    %v1137 = vpop.f32.mrb[0].mxu0
    %v1138 = vadd.f32 %v1047, %v1137
    %v1139 = vpop.f32.mrb[0].mxu0
    %1140 = vmatprep.mubr.f32.mxu0 0.0
    %1141 = vmatmul.mubr.f32.gmra.mrb[0].mxu0 %v1059
    %v1142 = vpop.f32.mrb[0].mxu0
    %v1143 = vadd.f32 %v1048, %v1142
    %v1144 = vpop.f32.mrb[0].mxu0
    %1145 = vdwg.mxu0
    %1146 = vadd.xlane.f32.xlu0 %v1128
    %v1147 = vpop.xlane.xlu0 %1146
    %1148 = vadd.xlane.f32.xlu0 %v1133
    %v1149 = vpop.xlane.xlu0 %1148
    %1150 = vadd.xlane.f32.xlu0 %v1138
    %v1151 = vpop.xlane.xlu0 %1150
    %1152 = vadd.xlane.f32.xlu0 %v1143
    %v1153 = vpop.xlane.xlu0 %1152
    %v1154 = vmul.f32 %v1147, %v166
    %v1155 = vmul.f32 %v1149, %v166
    %v1156 = vmul.f32 %v1151, %v166
    %v1157 = vmul.f32 %v1153, %v166
    %v1158 = vsub.f32 %v1128, %v1154
    %v1159 = vsub.f32 %v1133, %v1155
    %v1160 = vsub.f32 %v1138, %v1156
    %v1161 = vsub.f32 %v1143, %v1157
    %v1162 = vmul.f32 %v1158, %v1158
    %v1163 = vmul.f32 %v1159, %v1159
    %v1164 = vmul.f32 %v1160, %v1160
    %v1165 = vmul.f32 %v1161, %v1161
    %1166 = vadd.xlane.f32.xlu0 %v1162
    %v1167 = vpop.xlane.xlu0 %1166
    %1168 = vadd.xlane.f32.xlu0 %v1163
    %v1169 = vpop.xlane.xlu0 %1168
    %1170 = vadd.xlane.f32.xlu0 %v1164
    %v1171 = vpop.xlane.xlu0 %1170
    %1172 = vadd.xlane.f32.xlu0 %v1165
    %v1173 = vpop.xlane.xlu0 %1172
    %v1174 = vmul.f32 %v1167, %v166
    %v1175 = vmul.f32 %v1169, %v166
    %v1176 = vmul.f32 %v1171, %v166
    %v1177 = vmul.f32 %v1173, %v166
    %v1178 = vadd.f32 %v1174, 1e-05
    %v1179 = vadd.f32 %v1175, 1e-05
    %v1180 = vadd.f32 %v1176, 1e-05
    %v1181 = vadd.f32 %v1177, 1e-05
    %v1182 = vrsqrt.pop %v1178
    %v1183 = vrsqrt.pop %v1179
    %v1184 = vrsqrt.pop %v1180
    %v1185 = vrsqrt.pop %v1181
    %v1186 = vmul.f32 %v1158, %v1182
    %v1187 = vmul.f32 %v1159, %v1183
    %v1188 = vmul.f32 %v1160, %v1184
    %v1189 = vmul.f32 %v1161, %v1185
    %s1190 = scalar_lea.vmem [#allocation2], 896
    %v1191 = vld [vmem:[%s1190] sm:$0xff]
    %v1192 = vld [vmem:[%s1190 + $0x8] sm:$0xff]
    %v1193 = vld [vmem:[%s1190 + $0x10] sm:$0xff]
    %v1194 = vld [vmem:[%s1190 + $0x18] sm:$0xff]
    %v1195 = vmul.f32 %v1186, %v1191
    %v1196 = vmul.f32 %v1187, %v1192
    %v1197 = vmul.f32 %v1188, %v1193
    %v1198 = vmul.f32 %v1189, %v1194
    %s1199 = scalar_lea.vmem [#allocation2], 960
    %v1200 = vld [vmem:[%s1199] sm:$0xff]
    %v1201 = vld [vmem:[%s1199 + $0x8] sm:$0xff]
    %v1202 = vld [vmem:[%s1199 + $0x10] sm:$0xff]
    %v1203 = vld [vmem:[%s1199 + $0x18] sm:$0xff]
    %v1204 = vadd.f32 %v1195, %v1200
    %v1205 = vadd.f32 %v1196, %v1201
    %v1206 = vadd.f32 %v1197, %v1202
    %v1207 = vadd.f32 %v1198, %v1203
    %s1208 = sld [smem:[#allocation6 + $0x4]]
    %v1209 = vstv %s1208
    %v1210 = vmul.f32 %v1209, %v1204
    %v1211 = vmul.f32 %v1209, %v1205
    %v1212 = vmul.f32 %v1209, %v1206
    %v1213 = vmul.f32 %v1209, %v1207
    %v1214 = vxor.u32 %v1210, 2147483648
    %v1215 = vxor.u32 %v1211, 2147483648
    %v1216 = vxor.u32 %v1212, 2147483648
    %v1217 = vxor.u32 %v1213, 2147483648
    %v1218 = vmul.f32 %v1214, 1.442695
    %v1219 = vpow.pop %v1218
    %v1220 = vmul.f32 %v1215, 1.442695
    %v1221 = vpow.pop %v1220
    %v1222 = vmul.f32 %v1216, 1.442695
    %v1223 = vpow.pop %v1222
    %v1224 = vmul.f32 %v1217, 1.442695
    %v1225 = vpow.pop %v1224
    %v1226 = vadd.f32 %v1219, 1.0
    %v1227 = vadd.f32 %v1221, 1.0
    %v1228 = vadd.f32 %v1223, 1.0
    %v1229 = vadd.f32 %v1225, 1.0
    %v1230 = vrcp.pop %v1226
    %v1231 = vmul.f32 1.0, %v1230
    %v1232 = vrcp.pop %v1227
    %v1233 = vmul.f32 1.0, %v1232
    %v1234 = vrcp.pop %v1228
    %v1235 = vmul.f32 1.0, %v1234
    %v1236 = vrcp.pop %v1229
    %v1237 = vmul.f32 1.0, %v1236
    %v1238 = vmul.f32 %v1204, %v1231
    %v1239 = vmul.f32 %v1205, %v1233
    %v1240 = vmul.f32 %v1206, %v1235
    %v1241 = vmul.f32 %v1207, %v1237
    %v1242 = vadd.f32 %v1238, %v1035
    %v1243 = vadd.f32 %v1239, %v1036
    %v1244 = vadd.f32 %v1240, %v1037
    %v1245 = vadd.f32 %v1241, %v1038
    %s1246 = scalar_lea.vmem %s2, 384
    %v1247 = vld [vmem:[%s1246] sm:$0xff]
    %v1248 = vld [vmem:[%s1246 + $0x8] sm:$0xff]
    %v1249 = vld [vmem:[%s1246 + $0x10] sm:$0xff]
    %v1250 = vld [vmem:[%s1246 + $0x18] sm:$0xff]
    %s1251 = scalar_lea.vmem [#allocation2], 1024
    %v1252 = vld [vmem:[%s1251] sm:$0xff]
    %v1253 = vld [vmem:[%s1251 + $0x8] sm:$0xff]
    %v1254 = vld [vmem:[%s1251 + $0x10] sm:$0xff]
    %v1255 = vld [vmem:[%s1251 + $0x18] sm:$0xff]
    %v1257 = vsel %vm60, %v1247, 0
    %v1260 = vsel %vm60, %v1248, 0
    %v1263 = vsel %vm60, %v1249, 0
    %v1266 = vsel %vm60, %v1250, 0
    %1268 = vmatprep.subr.mxu0 0.0
    %1269 = vmatpush1.msra.mxu0 %v1242
    %1270 = vmatprep.subr.mxu0 0.0
    %1271 = vmatpush1.msra.mxu0 %v1243
    %1272 = vmatprep.subr.mxu0 0.0
    %1273 = vmatpush1.msra.mxu0 %v1244
    %1274 = vmatprep.subr.mxu0 0.0
    %1275 = vmatpush1.msra.mxu0 %v1245
    %1276 = vmatprep.subr.mxu0 0.0
    %1277 = vmatpush1.msra.mxu0 0.0
    %1278 = vmatprep.subr.mxu0 0.0
    %1279 = vmatpush1.msra.mxu0 0.0
    %1280 = vmatprep.subr.mxu0 0.0
    %1281 = vmatpush1.msra.mxu0 0.0
    %1282 = vmatprep.subr.mxu0 0.0
    %1283 = vmatpush1.msra.mxu0 0.0
    %1284 = vmatprep.subr.mxu0 0.0
    %1285 = vmatpush1.msra.mxu0 0.0
    %1286 = vmatprep.subr.mxu0 0.0
    %1287 = vmatpush1.msra.mxu0 0.0
    %1288 = vmatprep.subr.mxu0 0.0
    %1289 = vmatpush1.msra.mxu0 0.0
    %1290 = vmatprep.subr.mxu0 0.0
    %1291 = vmatpush1.msra.mxu0 0.0
    %1292 = vmatprep.subr.mxu0 0.0
    %1293 = vmatpush1.msra.mxu0 0.0
    %1294 = vmatprep.subr.mxu0 0.0
    %1295 = vmatpush1.msra.mxu0 0.0
    %1296 = vmatprep.subr.mxu0 0.0
    %1297 = vmatpush1.msra.mxu0 0.0
    %1298 = vmatprep.subr.mxu0 0.0
    %1299 = vmatpush1.msra.mxu0 0.0
    %1300 = vmatprep.subr.mxu0 0.0
    %1301 = vmatpush1.msra.mxu0 0.0
    %1302 = vmatprep.subr.mxu0 0.0
    %1303 = vmatpush1.msra.mxu0 0.0
    %1304 = vmatprep.subr.mxu0 0.0
    %1305 = vmatpush1.msra.mxu0 0.0
    %1306 = vmatprep.subr.mxu0 0.0
    %1307 = vmatpush1.msra.mxu0 0.0
    %1308 = vmatprep.subr.mxu0 0.0
    %1309 = vmatpush1.msra.mxu0 0.0
    %1310 = vmatprep.subr.mxu0 0.0
    %1311 = vmatpush1.msra.mxu0 0.0
    %1312 = vmatprep.subr.mxu0 0.0
    %1313 = vmatpush1.msra.mxu0 0.0
    %1314 = vmatprep.subr.mxu0 0.0
    %1315 = vmatpush1.msra.mxu0 0.0
    %1316 = vmatprep.subr.mxu0 0.0
    %1317 = vmatpush1.msra.mxu0 0.0
    %1318 = vmatprep.subr.mxu0 0.0
    %1319 = vmatpush1.msra.mxu0 0.0
    %1320 = vmatprep.subr.mxu0 0.0
    %1321 = vmatpush1.msra.mxu0 0.0
    %1322 = vmatprep.subr.mxu0 0.0
    %1323 = vmatpush1.msra.mxu0 0.0
    %1324 = vmatprep.subr.mxu0 0.0
    %1325 = vmatpush1.msra.mxu0 0.0
    %1326 = vmatprep.subr.mxu0 0.0
    %1327 = vmatpush1.msra.mxu0 0.0
    %1328 = vmatprep.subr.mxu0 0.0
    %1329 = vmatpush1.msra.mxu0 0.0
    %1330 = vmatprep.subr.mxu0 0.0
    %1331 = vmatpush1.msra.mxu0 0.0
    %1332 = vmatprep.mubr.f32.mxu0 0.0
    %1333 = vmatmul.mubr.f32.gmra.mrb[0].mxu0 %v1257
    %v1334 = vpop.f32.mrb[0].mxu0
    %v1335 = vadd.f32 %v1252, %v1334
    %v1336 = vpop.f32.mrb[0].mxu0
    %1337 = vmatprep.mubr.f32.mxu0 0.0
    %1338 = vmatmul.mubr.f32.gmra.mrb[0].mxu0 %v1260
    %v1339 = vpop.f32.mrb[0].mxu0
    %v1340 = vadd.f32 %v1253, %v1339
    %v1341 = vpop.f32.mrb[0].mxu0
    %1342 = vmatprep.mubr.f32.mxu0 0.0
    %1343 = vmatmul.mubr.f32.gmra.mrb[0].mxu0 %v1263
    %v1344 = vpop.f32.mrb[0].mxu0
    %v1345 = vadd.f32 %v1254, %v1344
    %v1346 = vpop.f32.mrb[0].mxu0
    %1347 = vmatprep.mubr.f32.mxu0 0.0
    %1348 = vmatmul.mubr.f32.gmra.mrb[0].mxu0 %v1266
    %v1349 = vpop.f32.mrb[0].mxu0
    %v1350 = vadd.f32 %v1255, %v1349
    %v1351 = vpop.f32.mrb[0].mxu0
    %1352 = vdwg.mxu0
    %1353 = vst [vmem:[#allocation7] sm:$0xff] %v1335
    %1354 = vst [vmem:[#allocation7 + $0x8] sm:$0xff] %v1340
    %1355 = vst [vmem:[#allocation7 + $0x10] sm:$0xff] %v1345
    %1356 = vst [vmem:[#allocation7 + $0x18] sm:$0xff] %v1350
    %1357 = vst [vmem:[#allocation7 + $0x20] sm:$0xff] %v762
    %1358 = vst [vmem:[#allocation7 + $0x28] sm:$0xff] %v767
    %1359 = vst [vmem:[#allocation7 + $0x30] sm:$0xff] %v772
    %1360 = vst [vmem:[#allocation7 + $0x38] sm:$0xff] %v777
    // Predicated region
    $region30: #{tpu_custom_call.1} parent=1 // pred_check
      _
    $region31: #{tpu_custom_call.1} parent=1 // pred_check_branch
      %1362 = sbr.rel (0) target = $region33
    $region32: #{tpu_custom_call.1} parent=1 // pred_region
      %s1364 = ssub.s32 1024, 1024
      %1365 = vsyncadd [#allocation4], %s1364
      %s1366 = sshll.u32 [#allocation7], 4
      %s1367 = int_to_ptr.vmem [resolvable:$true] %s1366
      %1372 = dma.vmem_to_hbm [thread:$0]  %s1367, 1024, %s5, [#allocation4], 128, 128, 8
    $region33: #{tpu_custom_call.1} parent=1 // pred_fallthru
      _
    // Predicated region
    $region34: #{tpu_custom_call.1} parent=1 // pred_check
      _
    $region35: #{tpu_custom_call.1} parent=1 // pred_check_branch
      %1374 = sbr.rel (0) target = $region37
    $region36: #{tpu_custom_call.1} parent=1 // pred_region
      %1375 = dma.done [#allocation4], 1024
    $region37: #{tpu_custom_call.1} parent=1 // pred_fallthru
      _
    %1376 = vsyncpa [#allocation3], 1
    %1377 = vsyncpa [#allocation4], 1
    %1378 = vsyncpa [#allocation5], 1

</llo_original>
